<compile_context>
chip_gen: v7x
topology: tpu7x:2x2x1
jax: 0.10.0
libtpu: 0.0.40
codegen_flags: <defaults>
</compile_context>

<pallas_src>
import math
from dataclasses import dataclass

import jax
import jax.numpy as jnp
from jax.experimental import pallas as pl
from jax.experimental.pallas import tpu as pltpu


@dataclass
class MinimalMambaArgs:
    d_model: int
    n_layer: int
    d_state: int = 16
    expand: int = 2
    dt_rank: int | str = "auto"
    d_conv: int = 4
    conv_bias: bool = True
    bias: bool = False

    def __post_init__(self):
        self.d_inner = int(self.expand * self.d_model)
        if self.dt_rank == "auto":
            self.dt_rank = math.ceil(self.d_model / 16)


CHUNK = 8        # timesteps processed per scan-loop iteration (one sublane tile)
CONV_PAD = 8     # sublane-aligned pad region at the top of the conv buffer (holds the tail)


def _silu(x):
    return x * (1.0 / (1.0 + jnp.exp(-x)))


def _softplus(x):
    return jnp.maximum(x, 0.0) + jnp.log1p(jnp.exp(-jnp.abs(x)))


def residual_mamba_kernel(
    # inputs
    x_ref,          # (1, Lt, d_model) f32
    rms_w_ref,      # (1, d_model)     f32
    w_in_x_ref,     # (d_model, d_inner)   bf16
    w_in_res_ref,   # (d_model, d_inner)   bf16
    conv_w_ref,     # (K, d_inner)         f32
    conv_b_ref,     # (1, d_inner)         f32
    w_dlr_ref,      # (d_inner, dt_rank)   bf16
    w_B_ref,        # (d_inner, d_state)   bf16
    w_C_ref,        # (d_inner, d_state)   bf16
    w_dt_ref,       # (dt_rank, d_inner)   bf16
    b_dt_ref,       # (1, d_inner)         f32
    a_log_t_ref,    # (d_state, d_inner)   f32
    d_ref,          # (1, d_inner)         f32
    w_out_ref,      # (d_inner, d_model)   bf16
    # outputs
    o_ref,          # (1, Lt, d_model) f32
    # scratch
    xs_scr,         # (d_state, d_inner) f32       SSM state, carried across L tiles
    conv_scr,       # (CONV_PAD + Lt, d_inner) f32 conv input + carried causal tail
    delta_scr,      # (Lt, d_inner) f32
    u_scr,          # (Lt, d_inner) f32
    bm_scr,         # (Lt, d_state) f32
    cm_scr,         # (Lt, d_state) f32
    y_scr,          # (Lt, d_inner) f32
):
    f32 = jnp.float32
    bf16 = jnp.bfloat16
    Lt = x_ref.shape[1]
    d_inner = d_ref.shape[1]
    n_state = a_log_t_ref.shape[0]
    K = conv_w_ref.shape[0]
    lt = pl.program_id(1)

    # ---- reset the carried state at the start of each sequence ----
    @pl.when(lt == 0)
    def _init():
        xs_scr[...] = jnp.zeros_like(xs_scr)
        conv_scr[pl.ds(CONV_PAD - (K - 1), K - 1), :] = jnp.zeros((K - 1, d_inner), f32)

    x_tile = x_ref[0]                                           # (Lt, d_model)

    # ---- RMSNorm (f32) ----
    ms = jnp.mean(x_tile * x_tile, axis=-1, keepdims=True)
    xn = (x_tile * jax.lax.rsqrt(ms + 1e-5) * rms_w_ref[...]).astype(bf16)

    # ---- in_proj, pre-split so both halves are lane-aligned matmul outputs ----
    xc = jnp.dot(xn, w_in_x_ref[...], preferred_element_type=f32)      # (Lt, d_inner)
    res = jnp.dot(xn, w_in_res_ref[...], preferred_element_type=f32)   # (Lt, d_inner)

    # ---- causal depthwise conv1d; previous tile's tail lives in conv_scr[:CONV_PAD] ----
    conv_scr[pl.ds(CONV_PAD, Lt), :] = xc                       # aligned full-tile store
    conv_w = conv_w_ref[...]
    acc = conv_b_ref[...]
    for k in range(K):                                          # K is a small static constant
        acc = acc + conv_scr[pl.ds(CONV_PAD - (K - 1) + k, Lt), :] * conv_w[k:k + 1, :]
    # save the last K-1 rows of xc as next tile's tail (after all tap reads above)
    conv_scr[pl.ds(CONV_PAD - (K - 1), K - 1), :] = xc[Lt - (K - 1):, :]
    u = _silu(acc)                                              # (Lt, d_inner) f32
    u_b = u.astype(bf16)

    # ---- x_proj split into three lane-aligned matmuls; dt_proj + softplus ----
    dlr = jnp.dot(u_b, w_dlr_ref[...], preferred_element_type=f32)     # (Lt, r)
    bm = jnp.dot(u_b, w_B_ref[...], preferred_element_type=f32)        # (Lt, n)
    cm = jnp.dot(u_b, w_C_ref[...], preferred_element_type=f32)        # (Lt, n)
    delta = _softplus(
        jnp.dot(dlr.astype(bf16), w_dt_ref[...], preferred_element_type=f32)
        + b_dt_ref[...])                                                # (Lt, d_inner)

    delta_scr[...] = delta
    u_scr[...] = u
    bm_scr[...] = bm
    cm_scr[...] = cm

    # ---- selective scan: state (d_state, d_inner), CHUNK timesteps per iteration ----
    A_t = -jnp.exp(a_log_t_ref[...])                            # (n, d_inner)
    Dp = d_ref[...]                                             # (1, d_inner)
    eye_n = jnp.eye(n_state, dtype=f32)                         # hoisted constant

    @pl.loop(0, Lt // CHUNK)
    def _scan(c):
        base = pl.multiple_of(c * CHUNK, CHUNK)
        delta_c = delta_scr[pl.ds(base, CHUNK), :]              # (CHUNK, d_inner)
        u_c = u_scr[pl.ds(base, CHUNK), :]                      # (CHUNK, d_inner)
        bm_c = bm_scr[pl.ds(base, CHUNK), :]                    # (CHUNK, n)
        cm_c = cm_scr[pl.ds(base, CHUNK), :]                    # (CHUNK, n)
        du_c = delta_c * u_c

        # move B rows lanes->sublanes with a tiny identity matmul: (n, n) @ (CHUNK, n)^T
        bm_t = jax.lax.dot_general(eye_n, bm_c, (((1,), (1,)), ((), ())),
                                   preferred_element_type=f32)  # (n, CHUNK)

        xs = xs_scr[...]                                        # (n, d_inner)
        rows = []
        for j in range(CHUNK):                                  # static unroll (8 steps)
            dA_j = jnp.exp(delta_c[j:j + 1, :] * A_t)           # (n, d_inner), exp on EUP
            dBu_j = du_c[j:j + 1, :] * bm_t[:, j:j + 1]         # (n, d_inner)
            xs = dA_j * xs + dBu_j
            # readout y_j = C_j @ state  (does not feed the recurrence -> pipelines on MXU)
            rows.append(jnp.dot(cm_c[j:j + 1, :], xs, preferred_element_type=f32))
        xs_scr[...] = xs
        y_scr[pl.ds(base, CHUNK), :] = jnp.concatenate(rows, axis=0) + u_c * Dp

    # ---- gate, out_proj, residual ----
    y = (y_scr[...] * _silu(res)).astype(bf16)
    o_ref[0] = jnp.dot(y, w_out_ref[...], preferred_element_type=f32) + x_tile


def init_params(key, args: MinimalMambaArgs):
    d_model, d_inner = args.d_model, args.d_inner
    n, r, K = args.d_state, args.dt_rank, args.d_conv
    ks = jax.random.split(key, 7)

    def init(k, shape, scale):
        return jax.random.normal(k, shape, jnp.float32) * scale

    return dict(
        rms_w=jnp.ones((1, d_model), jnp.float32),
        w_in=init(ks[0], (2 * d_inner, d_model), 0.05),    # nn.Linear weight (out, in), bias=False
        conv_w=init(ks[1], (d_inner, K), 0.2),             # depthwise conv weight (d_inner, 1, K) squeezed
        conv_b=init(ks[2], (1, d_inner), 0.1),
        w_x=init(ks[3], (r + 2 * n, d_inner), 0.1),        # x_proj (out, in), bias=False
        w_dt=init(ks[4], (d_inner, r), 0.5),               # dt_proj (out, in)
        b_dt=init(ks[5], (1, d_inner), 0.1),
        a_log=jnp.log(jnp.broadcast_to(
            jnp.arange(1, n + 1, dtype=jnp.float32), (d_inner, n))),
        D=jnp.ones((1, d_inner), jnp.float32),
        w_out=init(ks[6], (d_model, d_inner), 0.05),       # out_proj (out, in), bias=False
    )


def residual_block_pallas(x, params, args: MinimalMambaArgs, *, l_tile=256):
    B, L, d_model = x.shape
    d_inner, n, r, K = args.d_inner, args.d_state, args.dt_rank, args.d_conv
    assert 2 <= K <= CONV_PAD + 1, "d_conv must fit the carried conv tail"

    # L-tile selection: multiples of CHUNK (padding the sequence at the end is causal-safe).
    if L >= l_tile:
        Lt = l_tile
    else:
        Lt = ((L + CHUNK - 1) // CHUNK) * CHUNK
    Lp = ((L + Lt - 1) // Lt) * Lt
    x_p = jnp.pad(x, ((0, 0), (0, Lp - L), (0, 0))) if Lp != L else x
    n_lt = Lp // Lt

    f32, bf16 = jnp.float32, jnp.bfloat16

    # Pre-transpose / pre-split weights so every in-kernel matmul is x @ W with a
    # lane-aligned output; matmul weights are stored in bf16 (MXU-native, half the DMA).
    w_in_t = params["w_in"].T                           # (d_model, 2*d_inner)
    w_in_x = w_in_t[:, :d_inner].astype(bf16)
    w_in_res = w_in_t[:, d_inner:].astype(bf16)
    conv_w_t = params["conv_w"].T.astype(f32)           # (K, d_inner)  elementwise -> keep f32
    w_x_t = params["w_x"].T                             # (d_inner, r + 2n)
    w_dlr = w_x_t[:, :r].astype(bf16)
    w_B = w_x_t[:, r:r + n].astype(bf16)
    w_C = w_x_t[:, r + n:].astype(bf16)
    w_dt_t = params["w_dt"].T.astype(bf16)              # (r, d_inner)
    a_log_t = params["a_log"].T.astype(f32)             # (n, d_inner)  state-friendly layout
    w_out_t = params["w_out"].T.astype(bf16)            # (d_inner, d_model)

    weights = (params["rms_w"], w_in_x, w_in_res, conv_w_t, params["conv_b"],
               w_dlr, w_B, w_C, w_dt_t, params["b_dt"], a_log_t, params["D"], w_out_t)

    def full(arr):
        nd = arr.ndim
        return pl.BlockSpec(arr.shape, lambda b, t, _nd=nd: (0,) * _nd)

    grid_spec = pltpu.PrefetchScalarGridSpec(
        num_scalar_prefetch=0,
        grid=(B, n_lt),
        in_specs=[pl.BlockSpec((1, Lt, d_model), lambda b, t: (b, t, 0))]
                 + [full(w) for w in weights],
        out_specs=pl.BlockSpec((1, Lt, d_model), lambda b, t: (b, t, 0)),
        scratch_shapes=[
            pltpu.VMEM((n, d_inner), f32),               # SSM state (carried over L tiles)
            pltpu.VMEM((CONV_PAD + Lt, d_inner), f32),   # conv input + carried tail
            pltpu.VMEM((Lt, d_inner), f32),              # delta
            pltpu.VMEM((Lt, d_inner), f32),              # u
            pltpu.VMEM((Lt, n), f32),                    # B
            pltpu.VMEM((Lt, n), f32),                    # C
            pltpu.VMEM((Lt, d_inner), f32),              # y
        ],
    )

    tokens = B * Lp
    mm_flops = 2 * tokens * (d_model * 2 * d_inner + d_inner * (r + 2 * n)
                             + r * d_inner + d_inner * d_model)
    scan_flops = tokens * d_inner * (6 * n + 2 * K + 8)
    weight_bytes = sum(int(w.size) * w.dtype.itemsize for w in weights)
    cost = pl.CostEstimate(
        flops=int(mm_flops + scan_flops),
        transcendentals=int(tokens * d_inner * (n + 6)),
        bytes_accessed=int(x_p.size * 4 + tokens * d_model * 4 + weight_bytes),
    )

    out = pl.pallas_call(
        residual_mamba_kernel,
        out_shape=jax.ShapeDtypeStruct((B, Lp, d_model), f32),
        grid_spec=grid_spec,
        compiler_params=pltpu.CompilerParams(
            dimension_semantics=("parallel", "arbitrary"),
            vmem_limit_bytes=64 * 1024 * 1024),
        cost_estimate=cost,
    )(x_p, *weights)

    return out[:, :L, :] if Lp != L else out


def residual_block_ref(x, params, args: MinimalMambaArgs):
    """Pure-JAX f32 reference mirroring the PyTorch forward."""
    d_inner, n, r, K = args.d_inner, args.d_state, args.dt_rank, args.d_conv
    B, L, _ = x.shape
    silu = lambda v: v * jax.nn.sigmoid(v)

    xn = x * jax.lax.rsqrt(jnp.mean(x * x, -1, keepdims=True) + 1e-5) * params["rms_w"][0]
    xr = xn @ params["w_in"].T
    xc, res = xr[..., :d_inner], xr[..., d_inner:]

    xpad = jnp.pad(xc, ((0, 0), (K - 1, 0), (0, 0)))
    conv = params["conv_b"][0] + sum(
        xpad[:, k:k + L, :] * params["conv_w"][:, k] for k in range(K))
    u = silu(conv)

    x_dbl = u @ params["w_x"].T
    delta = jax.nn.softplus(x_dbl[..., :r] @ params["w_dt"].T + params["b_dt"][0])
    Bm = x_dbl[..., r:r + n]
    Cm = x_dbl[..., r + n:r + 2 * n]

    A = -jnp.exp(params["a_log"])
    deltaA = jnp.exp(jnp.einsum("bld,dn->bldn", delta, A))
    deltaBu = jnp.einsum("bld,bln,bld->bldn", delta, Bm, u)

    def step(xs, inp):
        dA, dBu, c = inp
        xs = dA * xs + dBu
        return xs, jnp.einsum("bdn,bn->bd", xs, c)

    xs0 = jnp.zeros((B, d_inner, n), jnp.float32)
    _, ys = jax.lax.scan(
        step, xs0,
        (deltaA.transpose(1, 0, 2, 3), deltaBu.transpose(1, 0, 2, 3), Cm.transpose(1, 0, 2)))
    y = ys.transpose(1, 0, 2) + u * params["D"][0]
    y = y * silu(res)
    return y @ params["w_out"].T + x


if __name__ == "__main__":
    args = MinimalMambaArgs(d_model=32, n_layer=1)   # d_inner=64, dt_rank=2, d_state=16, d_conv=4
    B, L = 2, 8

    key = jax.random.PRNGKey(0)
    kx, kp = jax.random.split(key)
    x = jax.random.normal(kx, (B, L, args.d_model), jnp.float32)
    params = init_params(kp, args)

    out = jax.block_until_ready(residual_block_pallas(x, params, args))

    ref = residual_block_ref(x, params, args)
    err = float(jnp.max(jnp.abs(out - ref)))
    assert out.shape == (B, L, args.d_model)
    assert bool(jnp.all(jnp.isfinite(out)))
    assert err < 2e-2, f"max abs err too large: {err}"
    print("KERNEL_OK")
</pallas_src>

<mosaic_0001>
module attributes {stable_mosaic.version = 11 : i64} {
  func.func @residual_mamba_kernel(%arg0: i32, %arg1: i32, %arg2: memref<1x8x32xf32, #tpu.memory_space<vmem>>, %arg3: memref<1x32xf32, #tpu.memory_space<vmem>>, %arg4: memref<32x64xbf16, #tpu.memory_space<vmem>>, %arg5: memref<32x64xbf16, #tpu.memory_space<vmem>>, %arg6: memref<4x64xf32, #tpu.memory_space<vmem>>, %arg7: memref<1x64xf32, #tpu.memory_space<vmem>>, %arg8: memref<64x2xbf16, #tpu.memory_space<vmem>>, %arg9: memref<64x16xbf16, #tpu.memory_space<vmem>>, %arg10: memref<64x16xbf16, #tpu.memory_space<vmem>>, %arg11: memref<2x64xbf16, #tpu.memory_space<vmem>>, %arg12: memref<1x64xf32, #tpu.memory_space<vmem>>, %arg13: memref<16x64xf32, #tpu.memory_space<vmem>>, %arg14: memref<1x64xf32, #tpu.memory_space<vmem>>, %arg15: memref<64x32xbf16, #tpu.memory_space<vmem>>, %arg16: memref<1x8x32xf32, #tpu.memory_space<vmem>>, %arg17: memref<16x64xf32, #tpu.memory_space<vmem>>, %arg18: memref<16x64xf32, #tpu.memory_space<vmem>>, %arg19: memref<8x64xf32, #tpu.memory_space<vmem>>, %arg20: memref<8x64xf32, #tpu.memory_space<vmem>>, %arg21: memref<8x16xf32, #tpu.memory_space<vmem>>, %arg22: memref<8x16xf32, #tpu.memory_space<vmem>>, %arg23: memref<8x64xf32, #tpu.memory_space<vmem>>) attributes {dimension_semantics = [#tpu.dimension_semantics<parallel>, #tpu.dimension_semantics<arbitrary>], iteration_bounds = array<i64: 2, 1>, scalar_prefetch = 0 : i64, scratch_operands = 7 : i64, tpu.core_type = #tpu.core_type<tc>, window_params = [{transform_indices = @transform_0, window_bounds = array<i64: 1, 8, 32>}, {pipeline_mode = #tpu.pipeline_mode<synchronous>, transform_indices = @transform_1, window_bounds = array<i64: 1, 32>}, {pipeline_mode = #tpu.pipeline_mode<synchronous>, transform_indices = @transform_2, window_bounds = array<i64: 32, 64>}, {pipeline_mode = #tpu.pipeline_mode<synchronous>, transform_indices = @transform_3, window_bounds = array<i64: 32, 64>}, {pipeline_mode = #tpu.pipeline_mode<synchronous>, transform_indices = @transform_4, window_bounds = array<i64: 4, 64>}, {pipeline_mode = #tpu.pipeline_mode<synchronous>, transform_indices = @transform_5, window_bounds = array<i64: 1, 64>}, {pipeline_mode = #tpu.pipeline_mode<synchronous>, transform_indices = @transform_6, window_bounds = array<i64: 64, 2>}, {pipeline_mode = #tpu.pipeline_mode<synchronous>, transform_indices = @transform_7, window_bounds = array<i64: 64, 16>}, {pipeline_mode = #tpu.pipeline_mode<synchronous>, transform_indices = @transform_8, window_bounds = array<i64: 64, 16>}, {pipeline_mode = #tpu.pipeline_mode<synchronous>, transform_indices = @transform_9, window_bounds = array<i64: 2, 64>}, {pipeline_mode = #tpu.pipeline_mode<synchronous>, transform_indices = @transform_10, window_bounds = array<i64: 1, 64>}, {pipeline_mode = #tpu.pipeline_mode<synchronous>, transform_indices = @transform_11, window_bounds = array<i64: 16, 64>}, {pipeline_mode = #tpu.pipeline_mode<synchronous>, transform_indices = @transform_12, window_bounds = array<i64: 1, 64>}, {pipeline_mode = #tpu.pipeline_mode<synchronous>, transform_indices = @transform_13, window_bounds = array<i64: 64, 32>}, {transform_indices = @transform_14, window_bounds = array<i64: 1, 8, 32>}]} {
    %c0_i32 = arith.constant 0 : i32
    %0 = arith.cmpi eq, %arg1, %c0_i32 : i32
    %1 = arith.extui %0 : i1 to i32
    %c0_i32_0 = arith.constant 0 : i32
    %2 = arith.cmpi ne, %1, %c0_i32_0 : i32
    scf.if %2 {
      %cst_90 = arith.constant 0.000000e+00 : f32
      %237 = vector.broadcast %cst_90 : f32 to vector<16x64xf32>
      %c0_91 = arith.constant 0 : index
      %c0_92 = arith.constant 0 : index
      %238 = vector.load %arg17[%c0_91, %c0_92] : memref<16x64xf32, #tpu.memory_space<vmem>>, vector<16x64xf32>
      tpu.vector_store %arg17[%c0_91, %c0_92], %237 {strides = array<i32>} : memref<16x64xf32, #tpu.memory_space<vmem>>, vector<16x64xf32>,
      %cst_93 = arith.constant 0.000000e+00 : f32
      %239 = vector.broadcast %cst_93 : f32 to vector<3x64xf32>
      %c5_94 = arith.constant 5 : index
      %c0_95 = arith.constant 0 : index
      %240 = vector.load %arg18[%c5_94, %c0_95] : memref<16x64xf32, #tpu.memory_space<vmem>>, vector<3x64xf32>
      tpu.vector_store %arg18[%c5_94, %c0_95], %239 {strides = array<i32>} : memref<16x64xf32, #tpu.memory_space<vmem>>, vector<3x64xf32>,
    } else {
    }
    %c0 = arith.constant 0 : index
    %c0_1 = arith.constant 0 : index
    %c0_2 = arith.constant 0 : index
    %3 = vector.load %arg2[%c0, %c0_1, %c0_2] : memref<1x8x32xf32, #tpu.memory_space<vmem>>, vector<1x8x32xf32>
    %4 = vector.shape_cast %3 : vector<1x8x32xf32> to vector<8x32xf32>
    %5 = arith.mulf %4, %4 : vector<8x32xf32>
    %cst = arith.constant dense<0.000000e+00> : vector<8xf32>
    %6 = vector.multi_reduction <add>, %5, %cst [1] : vector<8x32xf32> to vector<8xf32>
    %7 = vector.shape_cast %6 : vector<8xf32> to vector<8x1xf32>
    %cst_3 = arith.constant 3.200000e+01 : f32
    %8 = vector.broadcast %cst_3 : f32 to vector<8x1xf32>
    %9 = arith.divf %7, %8 : vector<8x1xf32>
    %cst_4 = arith.constant 9.99999974E-6 : f32
    %10 = vector.broadcast %cst_4 : f32 to vector<8x1xf32>
    %11 = arith.addf %9, %10 : vector<8x1xf32>
    %12 = math.rsqrt %11 : vector<8x1xf32>
    %13 = vector.broadcast %12 : vector<8x1xf32> to vector<8x32xf32>
    %14 = arith.mulf %4, %13 : vector<8x32xf32>
    %c0_5 = arith.constant 0 : index
    %c0_6 = arith.constant 0 : index
    %15 = vector.load %arg3[%c0_5, %c0_6] : memref<1x32xf32, #tpu.memory_space<vmem>>, vector<1x32xf32>
    %16 = vector.broadcast %15 : vector<1x32xf32> to vector<8x32xf32>
    %17 = arith.mulf %14, %16 : vector<8x32xf32>
    %18 = arith.truncf %17 : vector<8x32xf32> to vector<8x32xbf16>
    %c0_7 = arith.constant 0 : index
    %c0_8 = arith.constant 0 : index
    %19 = vector.load %arg4[%c0_7, %c0_8] : memref<32x64xbf16, #tpu.memory_space<vmem>>, vector<32x64xbf16>
    %cst_9 = arith.constant dense<0.000000e+00> : vector<8x64xf32>
    %20 = tpu.matmul %18, %19, %cst_9 {dimension_numbers = #tpu.dot_dimension_numbers<[1], [0], [0], [1], [0, 0, 1, 1], [], []>} : vector<8x32xbf16>, vector<32x64xbf16>, vector<8x64xf32> -> vector<8x64xf32>
    %c0_10 = arith.constant 0 : index
    %c0_11 = arith.constant 0 : index
    %21 = vector.load %arg5[%c0_10, %c0_11] : memref<32x64xbf16, #tpu.memory_space<vmem>>, vector<32x64xbf16>
    %cst_12 = arith.constant dense<0.000000e+00> : vector<8x64xf32>
    %22 = tpu.matmul %18, %21, %cst_12 {dimension_numbers = #tpu.dot_dimension_numbers<[1], [0], [0], [1], [0, 0, 1, 1], [], []>} : vector<8x32xbf16>, vector<32x64xbf16>, vector<8x64xf32> -> vector<8x64xf32>
    %c8 = arith.constant 8 : index
    %c0_13 = arith.constant 0 : index
    %23 = vector.load %arg18[%c8, %c0_13] : memref<16x64xf32, #tpu.memory_space<vmem>>, vector<8x64xf32>
    tpu.vector_store %arg18[%c8, %c0_13], %20 {strides = array<i32>} : memref<16x64xf32, #tpu.memory_space<vmem>>, vector<8x64xf32>,
    %c0_14 = arith.constant 0 : index
    %c0_15 = arith.constant 0 : index
    %24 = vector.load %arg6[%c0_14, %c0_15] : memref<4x64xf32, #tpu.memory_space<vmem>>, vector<4x64xf32>
    %c0_16 = arith.constant 0 : index
    %c0_17 = arith.constant 0 : index
    %25 = vector.load %arg7[%c0_16, %c0_17] : memref<1x64xf32, #tpu.memory_space<vmem>>, vector<1x64xf32>
    %c5 = arith.constant 5 : index
    %c0_18 = arith.constant 0 : index
    %26 = vector.load %arg18[%c5, %c0_18] : memref<16x64xf32, #tpu.memory_space<vmem>>, vector<8x64xf32>
    %27 = vector.extract_strided_slice %24 {offsets = [0, 0], sizes = [1, 64], strides = [1, 1]} : vector<4x64xf32> to vector<1x64xf32>
    %28 = vector.broadcast %27 : vector<1x64xf32> to vector<8x64xf32>
    %29 = arith.mulf %26, %28 : vector<8x64xf32>
    %30 = vector.broadcast %25 : vector<1x64xf32> to vector<8x64xf32>
    %31 = arith.addf %30, %29 : vector<8x64xf32>
    %c6 = arith.constant 6 : index
    %c0_19 = arith.constant 0 : index
    %32 = vector.load %arg18[%c6, %c0_19] : memref<16x64xf32, #tpu.memory_space<vmem>>, vector<8x64xf32>
    %33 = vector.extract_strided_slice %24 {offsets = [1, 0], sizes = [1, 64], strides = [1, 1]} : vector<4x64xf32> to vector<1x64xf32>
    %34 = vector.broadcast %33 : vector<1x64xf32> to vector<8x64xf32>
    %35 = arith.mulf %32, %34 : vector<8x64xf32>
    %36 = arith.addf %31, %35 : vector<8x64xf32>
    %c7 = arith.constant 7 : index
    %c0_20 = arith.constant 0 : index
    %37 = vector.load %arg18[%c7, %c0_20] : memref<16x64xf32, #tpu.memory_space<vmem>>, vector<8x64xf32>
    %38 = vector.extract_strided_slice %24 {offsets = [2, 0], sizes = [1, 64], strides = [1, 1]} : vector<4x64xf32> to vector<1x64xf32>
    %39 = vector.broadcast %38 : vector<1x64xf32> to vector<8x64xf32>
    %40 = arith.mulf %37, %39 : vector<8x64xf32>
    %41 = arith.addf %36, %40 : vector<8x64xf32>
    %c8_21 = arith.constant 8 : index
    %c0_22 = arith.constant 0 : index
    %42 = vector.load %arg18[%c8_21, %c0_22] : memref<16x64xf32, #tpu.memory_space<vmem>>, vector<8x64xf32>
    %43 = vector.extract_strided_slice %24 {offsets = [3, 0], sizes = [1, 64], strides = [1, 1]} : vector<4x64xf32> to vector<1x64xf32>
    %44 = vector.broadcast %43 : vector<1x64xf32> to vector<8x64xf32>
    %45 = arith.mulf %42, %44 : vector<8x64xf32>
    %46 = arith.addf %41, %45 : vector<8x64xf32>
    %47 = vector.extract_strided_slice %20 {offsets = [5, 0], sizes = [3, 64], strides = [1, 1]} : vector<8x64xf32> to vector<3x64xf32>
    %c5_23 = arith.constant 5 : index
    %c0_24 = arith.constant 0 : index
    %48 = vector.load %arg18[%c5_23, %c0_24] : memref<16x64xf32, #tpu.memory_space<vmem>>, vector<3x64xf32>
    tpu.vector_store %arg18[%c5_23, %c0_24], %47 {strides = array<i32>} : memref<16x64xf32, #tpu.memory_space<vmem>>, vector<3x64xf32>,
    %cst_25 = arith.constant 0.000000e+00 : f32
    %49 = vector.broadcast %cst_25 : f32 to vector<8x64xf32>
    %50 = arith.subf %49, %46 : vector<8x64xf32>
    %51 = math.exp %50 : vector<8x64xf32>
    %cst_26 = arith.constant 1.000000e+00 : f32
    %52 = vector.broadcast %cst_26 : f32 to vector<8x64xf32>
    %53 = arith.addf %52, %51 : vector<8x64xf32>
    %cst_27 = arith.constant 1.000000e+00 : f32
    %54 = vector.broadcast %cst_27 : f32 to vector<8x64xf32>
    %55 = arith.divf %54, %53 : vector<8x64xf32>
    %56 = arith.mulf %46, %55 : vector<8x64xf32>
    %57 = arith.truncf %56 : vector<8x64xf32> to vector<8x64xbf16>
    %c0_28 = arith.constant 0 : index
    %c0_29 = arith.constant 0 : index
    %58 = vector.load %arg8[%c0_28, %c0_29] : memref<64x2xbf16, #tpu.memory_space<vmem>>, vector<64x2xbf16>
    %cst_30 = arith.constant dense<0.000000e+00> : vector<8x2xf32>
    %59 = tpu.matmul %57, %58, %cst_30 {dimension_numbers = #tpu.dot_dimension_numbers<[1], [0], [0], [1], [0, 0, 1, 1], [], []>} : vector<8x64xbf16>, vector<64x2xbf16>, vector<8x2xf32> -> vector<8x2xf32>
    %c0_31 = arith.constant 0 : index
    %c0_32 = arith.constant 0 : index
    %60 = vector.load %arg9[%c0_31, %c0_32] : memref<64x16xbf16, #tpu.memory_space<vmem>>, vector<64x16xbf16>
    %cst_33 = arith.constant dense<0.000000e+00> : vector<8x16xf32>
    %61 = tpu.matmul %57, %60, %cst_33 {dimension_numbers = #tpu.dot_dimension_numbers<[1], [0], [0], [1], [0, 0, 1, 1], [], []>} : vector<8x64xbf16>, vector<64x16xbf16>, vector<8x16xf32> -> vector<8x16xf32>
    %c0_34 = arith.constant 0 : index
    %c0_35 = arith.constant 0 : index
    %62 = vector.load %arg10[%c0_34, %c0_35] : memref<64x16xbf16, #tpu.memory_space<vmem>>, vector<64x16xbf16>
    %cst_36 = arith.constant dense<0.000000e+00> : vector<8x16xf32>
    %63 = tpu.matmul %57, %62, %cst_36 {dimension_numbers = #tpu.dot_dimension_numbers<[1], [0], [0], [1], [0, 0, 1, 1], [], []>} : vector<8x64xbf16>, vector<64x16xbf16>, vector<8x16xf32> -> vector<8x16xf32>
    %64 = arith.truncf %59 : vector<8x2xf32> to vector<8x2xbf16>
    %c0_37 = arith.constant 0 : index
    %c0_38 = arith.constant 0 : index
    %65 = vector.load %arg11[%c0_37, %c0_38] : memref<2x64xbf16, #tpu.memory_space<vmem>>, vector<2x64xbf16>
    %cst_39 = arith.constant dense<0.000000e+00> : vector<8x64xf32>
    %66 = tpu.matmul %64, %65, %cst_39 {dimension_numbers = #tpu.dot_dimension_numbers<[1], [0], [0], [1], [0, 0, 1, 1], [], []>} : vector<8x2xbf16>, vector<2x64xbf16>, vector<8x64xf32> -> vector<8x64xf32>
    %c0_40 = arith.constant 0 : index
    %c0_41 = arith.constant 0 : index
    %67 = vector.load %arg12[%c0_40, %c0_41] : memref<1x64xf32, #tpu.memory_space<vmem>>, vector<1x64xf32>
    %68 = vector.broadcast %67 : vector<1x64xf32> to vector<8x64xf32>
    %69 = arith.addf %66, %68 : vector<8x64xf32>
    %cst_42 = arith.constant 0.000000e+00 : f32
    %70 = vector.broadcast %cst_42 : f32 to vector<8x64xf32>
    %71 = arith.maximumf %69, %70 : vector<8x64xf32>
    %72 = math.absf %69 : vector<8x64xf32>
    %cst_43 = arith.constant 0.000000e+00 : f32
    %73 = vector.broadcast %cst_43 : f32 to vector<8x64xf32>
    %74 = arith.subf %73, %72 : vector<8x64xf32>
    %75 = math.exp %74 : vector<8x64xf32>
    %76 = math.log1p %75 : vector<8x64xf32>
    %77 = arith.addf %71, %76 : vector<8x64xf32>
    %c0_44 = arith.constant 0 : index
    %c0_45 = arith.constant 0 : index
    %78 = vector.load %arg19[%c0_44, %c0_45] : memref<8x64xf32, #tpu.memory_space<vmem>>, vector<8x64xf32>
    tpu.vector_store %arg19[%c0_44, %c0_45], %77 {strides = array<i32>} : memref<8x64xf32, #tpu.memory_space<vmem>>, vector<8x64xf32>,
    %c0_46 = arith.constant 0 : index
    %c0_47 = arith.constant 0 : index
    %79 = vector.load %arg20[%c0_46, %c0_47] : memref<8x64xf32, #tpu.memory_space<vmem>>, vector<8x64xf32>
    tpu.vector_store %arg20[%c0_46, %c0_47], %56 {strides = array<i32>} : memref<8x64xf32, #tpu.memory_space<vmem>>, vector<8x64xf32>,
    %c0_48 = arith.constant 0 : index
    %c0_49 = arith.constant 0 : index
    %80 = vector.load %arg21[%c0_48, %c0_49] : memref<8x16xf32, #tpu.memory_space<vmem>>, vector<8x16xf32>
    tpu.vector_store %arg21[%c0_48, %c0_49], %61 {strides = array<i32>} : memref<8x16xf32, #tpu.memory_space<vmem>>, vector<8x16xf32>,
    %c0_50 = arith.constant 0 : index
    %c0_51 = arith.constant 0 : index
    %81 = vector.load %arg22[%c0_50, %c0_51] : memref<8x16xf32, #tpu.memory_space<vmem>>, vector<8x16xf32>
    tpu.vector_store %arg22[%c0_50, %c0_51], %63 {strides = array<i32>} : memref<8x16xf32, #tpu.memory_space<vmem>>, vector<8x16xf32>,
    %c0_52 = arith.constant 0 : index
    %c0_53 = arith.constant 0 : index
    %82 = vector.load %arg13[%c0_52, %c0_53] : memref<16x64xf32, #tpu.memory_space<vmem>>, vector<16x64xf32>
    %83 = math.exp %82 : vector<16x64xf32>
    %cst_54 = arith.constant 0.000000e+00 : f32
    %84 = vector.broadcast %cst_54 : f32 to vector<16x64xf32>
    %85 = arith.subf %84, %83 : vector<16x64xf32>
    %c0_55 = arith.constant 0 : index
    %c0_56 = arith.constant 0 : index
    %86 = vector.load %arg14[%c0_55, %c0_56] : memref<1x64xf32, #tpu.memory_space<vmem>>, vector<1x64xf32>
    %87 = tpu.iota {dimensions = array<i32: 0>} : vector<16x16xi32>
    %88 = tpu.iota {dimensions = array<i32: 1>} : vector<16x16xi32>
    %c0_i32_57 = arith.constant 0 : i32
    %89 = vector.broadcast %c0_i32_57 : i32 to vector<16x16xi32>
    %90 = arith.addi %87, %89 : vector<16x16xi32>
    %91 = arith.cmpi eq, %90, %88 : vector<16x16xi32>
    %92 = arith.extui %91 : vector<16x16xi1> to vector<16x16xi32>
    %93 = arith.sitofp %92 : vector<16x16xi32> to vector<16x16xf32>
    %c0_i32_58 = arith.constant 0 : i32
    %c1_i32 = arith.constant 1 : i32
    %94 = arith.muli %c0_i32_58, %c1_i32 : i32
    %c0_i32_59 = arith.constant 0 : i32
    %95 = arith.addi %c0_i32_59, %94 : i32
    %c8_i32 = arith.constant 8 : i32
    %96 = arith.muli %95, %c8_i32 : i32
    %97 = tpu.assume_multiple %96, 8 : i32
    %98 = arith.index_cast %97 : i32 to index
    %c0_60 = arith.constant 0 : index
    %99 = vector.load %arg19[%98, %c0_60] : memref<8x64xf32, #tpu.memory_space<vmem>>, vector<8x64xf32>
    %100 = arith.index_cast %97 : i32 to index
    %c0_61 = arith.constant 0 : index
    %101 = vector.load %arg20[%100, %c0_61] : memref<8x64xf32, #tpu.memory_space<vmem>>, vector<8x64xf32>
    %102 = arith.index_cast %97 : i32 to index
    %c0_62 = arith.constant 0 : index
    %103 = vector.load %arg21[%102, %c0_62] : memref<8x16xf32, #tpu.memory_space<vmem>>, vector<8x16xf32>
    %104 = arith.index_cast %97 : i32 to index
    %c0_63 = arith.constant 0 : index
    %105 = vector.load %arg22[%104, %c0_63] : memref<8x16xf32, #tpu.memory_space<vmem>>, vector<8x16xf32>
    %106 = arith.mulf %99, %101 : vector<8x64xf32>
    %cst_64 = arith.constant dense<0.000000e+00> : vector<16x8xf32>
    %107 = tpu.matmul %93, %103, %cst_64 {dimension_numbers = #tpu.dot_dimension_numbers<[1], [1], [0], [0], [0, 0, 1, 0], [], []>} : vector<16x16xf32>, vector<8x16xf32>, vector<16x8xf32> -> vector<16x8xf32>
    %c0_65 = arith.constant 0 : index
    %c0_66 = arith.constant 0 : index
    %108 = vector.load %arg17[%c0_65, %c0_66] : memref<16x64xf32, #tpu.memory_space<vmem>>, vector<16x64xf32>
    %109 = vector.extract_strided_slice %99 {offsets = [0, 0], sizes = [1, 64], strides = [1, 1]} : vector<8x64xf32> to vector<1x64xf32>
    %110 = vector.broadcast %109 : vector<1x64xf32> to vector<16x64xf32>
    %111 = arith.mulf %110, %85 : vector<16x64xf32>
    %112 = math.exp %111 : vector<16x64xf32>
    %113 = vector.extract_strided_slice %106 {offsets = [0, 0], sizes = [1, 64], strides = [1, 1]} : vector<8x64xf32> to vector<1x64xf32>
    %114 = vector.extract_strided_slice %107 {offsets = [0, 0], sizes = [16, 1], strides = [1, 1]} : vector<16x8xf32> to vector<16x1xf32>
    %115 = vector.broadcast %113 : vector<1x64xf32> to vector<16x64xf32>
    %116 = vector.broadcast %114 : vector<16x1xf32> to vector<16x64xf32>
    %117 = arith.mulf %115, %116 : vector<16x64xf32>
    %118 = arith.mulf %112, %108 : vector<16x64xf32>
    %119 = arith.addf %118, %117 : vector<16x64xf32>
    %120 = vector.extract_strided_slice %105 {offsets = [0, 0], sizes = [1, 16], strides = [1, 1]} : vector<8x16xf32> to vector<1x16xf32>
    %cst_67 = arith.constant dense<0.000000e+00> : vector<1x64xf32>
    %121 = tpu.matmul %120, %119, %cst_67 {dimension_numbers = #tpu.dot_dimension_numbers<[1], [0], [0], [1], [0, 0, 1, 1], [], []>} : vector<1x16xf32>, vector<16x64xf32>, vector<1x64xf32> -> vector<1x64xf32>
    %122 = vector.extract_strided_slice %99 {offsets = [1, 0], sizes = [1, 64], strides = [1, 1]} : vector<8x64xf32> to vector<1x64xf32>
    %123 = vector.broadcast %122 : vector<1x64xf32> to vector<16x64xf32>
    %124 = arith.mulf %123, %85 : vector<16x64xf32>
    %125 = math.exp %124 : vector<16x64xf32>
    %126 = vector.extract_strided_slice %106 {offsets = [1, 0], sizes = [1, 64], strides = [1, 1]} : vector<8x64xf32> to vector<1x64xf32>
    %127 = vector.extract_strided_slice %107 {offsets = [0, 1], sizes = [16, 1], strides = [1, 1]} : vector<16x8xf32> to vector<16x1xf32>
    %128 = vector.broadcast %126 : vector<1x64xf32> to vector<16x64xf32>
    %129 = vector.broadcast %127 : vector<16x1xf32> to vector<16x64xf32>
    %130 = arith.mulf %128, %129 : vector<16x64xf32>
    %131 = arith.mulf %125, %119 : vector<16x64xf32>
    %132 = arith.addf %131, %130 : vector<16x64xf32>
    %133 = vector.extract_strided_slice %105 {offsets = [1, 0], sizes = [1, 16], strides = [1, 1]} : vector<8x16xf32> to vector<1x16xf32>
    %cst_68 = arith.constant dense<0.000000e+00> : vector<1x64xf32>
    %134 = tpu.matmul %133, %132, %cst_68 {dimension_numbers = #tpu.dot_dimension_numbers<[1], [0], [0], [1], [0, 0, 1, 1], [], []>} : vector<1x16xf32>, vector<16x64xf32>, vector<1x64xf32> -> vector<1x64xf32>
    %135 = vector.extract_strided_slice %99 {offsets = [2, 0], sizes = [1, 64], strides = [1, 1]} : vector<8x64xf32> to vector<1x64xf32>
    %136 = vector.broadcast %135 : vector<1x64xf32> to vector<16x64xf32>
    %137 = arith.mulf %136, %85 : vector<16x64xf32>
    %138 = math.exp %137 : vector<16x64xf32>
    %139 = vector.extract_strided_slice %106 {offsets = [2, 0], sizes = [1, 64], strides = [1, 1]} : vector<8x64xf32> to vector<1x64xf32>
    %140 = vector.extract_strided_slice %107 {offsets = [0, 2], sizes = [16, 1], strides = [1, 1]} : vector<16x8xf32> to vector<16x1xf32>
    %141 = vector.broadcast %139 : vector<1x64xf32> to vector<16x64xf32>
    %142 = vector.broadcast %140 : vector<16x1xf32> to vector<16x64xf32>
    %143 = arith.mulf %141, %142 : vector<16x64xf32>
    %144 = arith.mulf %138, %132 : vector<16x64xf32>
    %145 = arith.addf %144, %143 : vector<16x64xf32>
    %146 = vector.extract_strided_slice %105 {offsets = [2, 0], sizes = [1, 16], strides = [1, 1]} : vector<8x16xf32> to vector<1x16xf32>
    %cst_69 = arith.constant dense<0.000000e+00> : vector<1x64xf32>
    %147 = tpu.matmul %146, %145, %cst_69 {dimension_numbers = #tpu.dot_dimension_numbers<[1], [0], [0], [1], [0, 0, 1, 1], [], []>} : vector<1x16xf32>, vector<16x64xf32>, vector<1x64xf32> -> vector<1x64xf32>
    %148 = vector.extract_strided_slice %99 {offsets = [3, 0], sizes = [1, 64], strides = [1, 1]} : vector<8x64xf32> to vector<1x64xf32>
    %149 = vector.broadcast %148 : vector<1x64xf32> to vector<16x64xf32>
    %150 = arith.mulf %149, %85 : vector<16x64xf32>
    %151 = math.exp %150 : vector<16x64xf32>
    %152 = vector.extract_strided_slice %106 {offsets = [3, 0], sizes = [1, 64], strides = [1, 1]} : vector<8x64xf32> to vector<1x64xf32>
    %153 = vector.extract_strided_slice %107 {offsets = [0, 3], sizes = [16, 1], strides = [1, 1]} : vector<16x8xf32> to vector<16x1xf32>
    %154 = vector.broadcast %152 : vector<1x64xf32> to vector<16x64xf32>
    %155 = vector.broadcast %153 : vector<16x1xf32> to vector<16x64xf32>
    %156 = arith.mulf %154, %155 : vector<16x64xf32>
    %157 = arith.mulf %151, %145 : vector<16x64xf32>
    %158 = arith.addf %157, %156 : vector<16x64xf32>
    %159 = vector.extract_strided_slice %105 {offsets = [3, 0], sizes = [1, 16], strides = [1, 1]} : vector<8x16xf32> to vector<1x16xf32>
    %cst_70 = arith.constant dense<0.000000e+00> : vector<1x64xf32>
    %160 = tpu.matmul %159, %158, %cst_70 {dimension_numbers = #tpu.dot_dimension_numbers<[1], [0], [0], [1], [0, 0, 1, 1], [], []>} : vector<1x16xf32>, vector<16x64xf32>, vector<1x64xf32> -> vector<1x64xf32>
    %161 = vector.extract_strided_slice %99 {offsets = [4, 0], sizes = [1, 64], strides = [1, 1]} : vector<8x64xf32> to vector<1x64xf32>
    %162 = vector.broadcast %161 : vector<1x64xf32> to vector<16x64xf32>
    %163 = arith.mulf %162, %85 : vector<16x64xf32>
    %164 = math.exp %163 : vector<16x64xf32>
    %165 = vector.extract_strided_slice %106 {offsets = [4, 0], sizes = [1, 64], strides = [1, 1]} : vector<8x64xf32> to vector<1x64xf32>
    %166 = vector.extract_strided_slice %107 {offsets = [0, 4], sizes = [16, 1], strides = [1, 1]} : vector<16x8xf32> to vector<16x1xf32>
    %167 = vector.broadcast %165 : vector<1x64xf32> to vector<16x64xf32>
    %168 = vector.broadcast %166 : vector<16x1xf32> to vector<16x64xf32>
    %169 = arith.mulf %167, %168 : vector<16x64xf32>
    %170 = arith.mulf %164, %158 : vector<16x64xf32>
    %171 = arith.addf %170, %169 : vector<16x64xf32>
    %172 = vector.extract_strided_slice %105 {offsets = [4, 0], sizes = [1, 16], strides = [1, 1]} : vector<8x16xf32> to vector<1x16xf32>
    %cst_71 = arith.constant dense<0.000000e+00> : vector<1x64xf32>
    %173 = tpu.matmul %172, %171, %cst_71 {dimension_numbers = #tpu.dot_dimension_numbers<[1], [0], [0], [1], [0, 0, 1, 1], [], []>} : vector<1x16xf32>, vector<16x64xf32>, vector<1x64xf32> -> vector<1x64xf32>
    %174 = vector.extract_strided_slice %99 {offsets = [5, 0], sizes = [1, 64], strides = [1, 1]} : vector<8x64xf32> to vector<1x64xf32>
    %175 = vector.broadcast %174 : vector<1x64xf32> to vector<16x64xf32>
    %176 = arith.mulf %175, %85 : vector<16x64xf32>
    %177 = math.exp %176 : vector<16x64xf32>
    %178 = vector.extract_strided_slice %106 {offsets = [5, 0], sizes = [1, 64], strides = [1, 1]} : vector<8x64xf32> to vector<1x64xf32>
    %179 = vector.extract_strided_slice %107 {offsets = [0, 5], sizes = [16, 1], strides = [1, 1]} : vector<16x8xf32> to vector<16x1xf32>
    %180 = vector.broadcast %178 : vector<1x64xf32> to vector<16x64xf32>
    %181 = vector.broadcast %179 : vector<16x1xf32> to vector<16x64xf32>
    %182 = arith.mulf %180, %181 : vector<16x64xf32>
    %183 = arith.mulf %177, %171 : vector<16x64xf32>
    %184 = arith.addf %183, %182 : vector<16x64xf32>
    %185 = vector.extract_strided_slice %105 {offsets = [5, 0], sizes = [1, 16], strides = [1, 1]} : vector<8x16xf32> to vector<1x16xf32>
    %cst_72 = arith.constant dense<0.000000e+00> : vector<1x64xf32>
    %186 = tpu.matmul %185, %184, %cst_72 {dimension_numbers = #tpu.dot_dimension_numbers<[1], [0], [0], [1], [0, 0, 1, 1], [], []>} : vector<1x16xf32>, vector<16x64xf32>, vector<1x64xf32> -> vector<1x64xf32>
    %187 = vector.extract_strided_slice %99 {offsets = [6, 0], sizes = [1, 64], strides = [1, 1]} : vector<8x64xf32> to vector<1x64xf32>
    %188 = vector.broadcast %187 : vector<1x64xf32> to vector<16x64xf32>
    %189 = arith.mulf %188, %85 : vector<16x64xf32>
    %190 = math.exp %189 : vector<16x64xf32>
    %191 = vector.extract_strided_slice %106 {offsets = [6, 0], sizes = [1, 64], strides = [1, 1]} : vector<8x64xf32> to vector<1x64xf32>
    %192 = vector.extract_strided_slice %107 {offsets = [0, 6], sizes = [16, 1], strides = [1, 1]} : vector<16x8xf32> to vector<16x1xf32>
    %193 = vector.broadcast %191 : vector<1x64xf32> to vector<16x64xf32>
    %194 = vector.broadcast %192 : vector<16x1xf32> to vector<16x64xf32>
    %195 = arith.mulf %193, %194 : vector<16x64xf32>
    %196 = arith.mulf %190, %184 : vector<16x64xf32>
    %197 = arith.addf %196, %195 : vector<16x64xf32>
    %198 = vector.extract_strided_slice %105 {offsets = [6, 0], sizes = [1, 16], strides = [1, 1]} : vector<8x16xf32> to vector<1x16xf32>
    %cst_73 = arith.constant dense<0.000000e+00> : vector<1x64xf32>
    %199 = tpu.matmul %198, %197, %cst_73 {dimension_numbers = #tpu.dot_dimension_numbers<[1], [0], [0], [1], [0, 0, 1, 1], [], []>} : vector<1x16xf32>, vector<16x64xf32>, vector<1x64xf32> -> vector<1x64xf32>
    %200 = vector.extract_strided_slice %99 {offsets = [7, 0], sizes = [1, 64], strides = [1, 1]} : vector<8x64xf32> to vector<1x64xf32>
    %201 = vector.broadcast %200 : vector<1x64xf32> to vector<16x64xf32>
    %202 = arith.mulf %201, %85 : vector<16x64xf32>
    %203 = math.exp %202 : vector<16x64xf32>
    %204 = vector.extract_strided_slice %106 {offsets = [7, 0], sizes = [1, 64], strides = [1, 1]} : vector<8x64xf32> to vector<1x64xf32>
    %205 = vector.extract_strided_slice %107 {offsets = [0, 7], sizes = [16, 1], strides = [1, 1]} : vector<16x8xf32> to vector<16x1xf32>
    %206 = vector.broadcast %204 : vector<1x64xf32> to vector<16x64xf32>
    %207 = vector.broadcast %205 : vector<16x1xf32> to vector<16x64xf32>
    %208 = arith.mulf %206, %207 : vector<16x64xf32>
    %209 = arith.mulf %203, %197 : vector<16x64xf32>
    %210 = arith.addf %209, %208 : vector<16x64xf32>
    %211 = vector.extract_strided_slice %105 {offsets = [7, 0], sizes = [1, 16], strides = [1, 1]} : vector<8x16xf32> to vector<1x16xf32>
    %cst_74 = arith.constant dense<0.000000e+00> : vector<1x64xf32>
    %212 = tpu.matmul %211, %210, %cst_74 {dimension_numbers = #tpu.dot_dimension_numbers<[1], [0], [0], [1], [0, 0, 1, 1], [], []>} : vector<1x16xf32>, vector<16x64xf32>, vector<1x64xf32> -> vector<1x64xf32>
    %c0_75 = arith.constant 0 : index
    %c0_76 = arith.constant 0 : index
    %213 = vector.load %arg17[%c0_75, %c0_76] : memref<16x64xf32, #tpu.memory_space<vmem>>, vector<16x64xf32>
    tpu.vector_store %arg17[%c0_75, %c0_76], %210 {strides = array<i32>} : memref<16x64xf32, #tpu.memory_space<vmem>>, vector<16x64xf32>,
    %214 = tpu.concatenate %121, %134, %147, %160, %173, %186, %199, %212 in 0 : vector<1x64xf32>, vector<1x64xf32>, vector<1x64xf32>, vector<1x64xf32>, vector<1x64xf32>, vector<1x64xf32>, vector<1x64xf32>, vector<1x64xf32> -> vector<8x64xf32>
    %215 = vector.broadcast %86 : vector<1x64xf32> to vector<8x64xf32>
    %216 = arith.mulf %101, %215 : vector<8x64xf32>
    %217 = arith.addf %214, %216 : vector<8x64xf32>
    %218 = arith.index_cast %97 : i32 to index
    %c0_77 = arith.constant 0 : index
    %219 = vector.load %arg23[%218, %c0_77] : memref<8x64xf32, #tpu.memory_space<vmem>>, vector<8x64xf32>
    tpu.vector_store %arg23[%218, %c0_77], %217 {strides = array<i32>} : memref<8x64xf32, #tpu.memory_space<vmem>>, vector<8x64xf32>,
    %c1_i32_78 = arith.constant 1 : i32
    %c0_79 = arith.constant 0 : index
    %c0_80 = arith.constant 0 : index
    %220 = vector.load %arg23[%c0_79, %c0_80] : memref<8x64xf32, #tpu.memory_space<vmem>>, vector<8x64xf32>
    %cst_81 = arith.constant 0.000000e+00 : f32
    %221 = vector.broadcast %cst_81 : f32 to vector<8x64xf32>
    %222 = arith.subf %221, %22 : vector<8x64xf32>
    %223 = math.exp %222 : vector<8x64xf32>
    %cst_82 = arith.constant 1.000000e+00 : f32
    %224 = vector.broadcast %cst_82 : f32 to vector<8x64xf32>
    %225 = arith.addf %224, %223 : vector<8x64xf32>
    %cst_83 = arith.constant 1.000000e+00 : f32
    %226 = vector.broadcast %cst_83 : f32 to vector<8x64xf32>
    %227 = arith.divf %226, %225 : vector<8x64xf32>
    %228 = arith.mulf %22, %227 : vector<8x64xf32>
    %229 = arith.mulf %220, %228 : vector<8x64xf32>
    %230 = arith.truncf %229 : vector<8x64xf32> to vector<8x64xbf16>
    %c0_84 = arith.constant 0 : index
    %c0_85 = arith.constant 0 : index
    %231 = vector.load %arg15[%c0_84, %c0_85] : memref<64x32xbf16, #tpu.memory_space<vmem>>, vector<64x32xbf16>
    %cst_86 = arith.constant dense<0.000000e+00> : vector<8x32xf32>
    %232 = tpu.matmul %230, %231, %cst_86 {dimension_numbers = #tpu.dot_dimension_numbers<[1], [0], [0], [1], [0, 0, 1, 1], [], []>} : vector<8x64xbf16>, vector<64x32xbf16>, vector<8x32xf32> -> vector<8x32xf32>
    %233 = arith.addf %232, %4 : vector<8x32xf32>
    %c0_87 = arith.constant 0 : index
    %c0_88 = arith.constant 0 : index
    %c0_89 = arith.constant 0 : index
    %234 = vector.load %arg16[%c0_87, %c0_88, %c0_89] : memref<1x8x32xf32, #tpu.memory_space<vmem>>, vector<1x8x32xf32>
    %235 = vector.shape_cast %234 : vector<1x8x32xf32> to vector<8x32xf32>
    %236 = vector.shape_cast %233 : vector<8x32xf32> to vector<1x8x32xf32>
    tpu.vector_store %arg16[%c0_87, %c0_88, %c0_89], %236 {strides = array<i32>} : memref<1x8x32xf32, #tpu.memory_space<vmem>>, vector<1x8x32xf32>,
    return
  }
  func.func @transform_0(%arg0: i32, %arg1: i32) -> (i32, i32, i32) {
    %c0_i32 = arith.constant 0 : i32
    %c0_i32_0 = arith.constant 0 : i32
    return %arg0, %arg1, %c0_i32 : i32, i32, i32
  }
  func.func @transform_1(%arg0: i32, %arg1: i32) -> (i32, i32) {
    %c0_i32 = arith.constant 0 : i32
    %c0_i32_0 = arith.constant 0 : i32
    %c0_i32_1 = arith.constant 0 : i32
    return %c0_i32, %c0_i32_0 : i32, i32
  }
  func.func @transform_2(%arg0: i32, %arg1: i32) -> (i32, i32) {
    %c0_i32 = arith.constant 0 : i32
    %c0_i32_0 = arith.constant 0 : i32
    %c0_i32_1 = arith.constant 0 : i32
    return %c0_i32, %c0_i32_0 : i32, i32
  }
  func.func @transform_3(%arg0: i32, %arg1: i32) -> (i32, i32) {
    %c0_i32 = arith.constant 0 : i32
    %c0_i32_0 = arith.constant 0 : i32
    %c0_i32_1 = arith.constant 0 : i32
    return %c0_i32, %c0_i32_0 : i32, i32
  }
  func.func @transform_4(%arg0: i32, %arg1: i32) -> (i32, i32) {
    %c0_i32 = arith.constant 0 : i32
    %c0_i32_0 = arith.constant 0 : i32
    %c0_i32_1 = arith.constant 0 : i32
    return %c0_i32, %c0_i32_0 : i32, i32
  }
  func.func @transform_5(%arg0: i32, %arg1: i32) -> (i32, i32) {
    %c0_i32 = arith.constant 0 : i32
    %c0_i32_0 = arith.constant 0 : i32
    %c0_i32_1 = arith.constant 0 : i32
    return %c0_i32, %c0_i32_0 : i32, i32
  }
  func.func @transform_6(%arg0: i32, %arg1: i32) -> (i32, i32) {
    %c0_i32 = arith.constant 0 : i32
    %c0_i32_0 = arith.constant 0 : i32
    %c0_i32_1 = arith.constant 0 : i32
    return %c0_i32, %c0_i32_0 : i32, i32
  }
  func.func @transform_7(%arg0: i32, %arg1: i32) -> (i32, i32) {
    %c0_i32 = arith.constant 0 : i32
    %c0_i32_0 = arith.constant 0 : i32
    %c0_i32_1 = arith.constant 0 : i32
    return %c0_i32, %c0_i32_0 : i32, i32
  }
  func.func @transform_8(%arg0: i32, %arg1: i32) -> (i32, i32) {
    %c0_i32 = arith.constant 0 : i32
    %c0_i32_0 = arith.constant 0 : i32
    %c0_i32_1 = arith.constant 0 : i32
    return %c0_i32, %c0_i32_0 : i32, i32
  }
  func.func @transform_9(%arg0: i32, %arg1: i32) -> (i32, i32) {
    %c0_i32 = arith.constant 0 : i32
    %c0_i32_0 = arith.constant 0 : i32
    %c0_i32_1 = arith.constant 0 : i32
    return %c0_i32, %c0_i32_0 : i32, i32
  }
  func.func @transform_10(%arg0: i32, %arg1: i32) -> (i32, i32) {
    %c0_i32 = arith.constant 0 : i32
    %c0_i32_0 = arith.constant 0 : i32
    %c0_i32_1 = arith.constant 0 : i32
    return %c0_i32, %c0_i32_0 : i32, i32
  }
  func.func @transform_11(%arg0: i32, %arg1: i32) -> (i32, i32) {
    %c0_i32 = arith.constant 0 : i32
    %c0_i32_0 = arith.constant 0 : i32
    %c0_i32_1 = arith.constant 0 : i32
    return %c0_i32, %c0_i32_0 : i32, i32
  }
  func.func @transform_12(%arg0: i32, %arg1: i32) -> (i32, i32) {
    %c0_i32 = arith.constant 0 : i32
    %c0_i32_0 = arith.constant 0 : i32
    %c0_i32_1 = arith.constant 0 : i32
    return %c0_i32, %c0_i32_0 : i32, i32
  }
  func.func @transform_13(%arg0: i32, %arg1: i32) -> (i32, i32) {
    %c0_i32 = arith.constant 0 : i32
    %c0_i32_0 = arith.constant 0 : i32
    %c0_i32_1 = arith.constant 0 : i32
    return %c0_i32, %c0_i32_0 : i32, i32
  }
  func.func @transform_14(%arg0: i32, %arg1: i32) -> (i32, i32, i32) {
    %c0_i32 = arith.constant 0 : i32
    %c0_i32_0 = arith.constant 0 : i32
    return %arg0, %arg1, %c0_i32 : i32, i32, i32
  }
}

</mosaic_0001>

<llo_original>
// kernel: tpu_custom_call.1
$region0: #{tpu_custom_call.1}
  #allocation0 [shape = 'u32[]', space=smem, size = 0x4, offset = 0x4, fixed_abs, tag = 'smem constant byte address 0x4 - core index']
  #allocation1 [shape = 'u32[144,128]{1,0:T(1,128)}', space=vmem, size = 0x12000, scoped, tag = 'internal scratch']
  #allocation2 [shape = 'f32[16,64]{1,0:T(8,128)}', space=vmem, size = 0x2000, scoped, tag = 'scratch operand']
  #allocation3 [shape = 'f32[16,64]{1,0:T(8,128)}', space=vmem, size = 0x2000, scoped, tag = 'scratch operand']
  #allocation4 [shape = 'f32[8,64]{1,0:T(8,128)}', space=vmem, size = 0x1000, scoped, tag = 'scratch operand']
  #allocation5 [shape = 'f32[8,64]{1,0:T(8,128)}', space=vmem, size = 0x1000, scoped, tag = 'scratch operand']
  #allocation6 [shape = 'f32[8,16]{1,0:T(8,128)}', space=vmem, size = 0x1000, scoped, tag = 'scratch operand']
  #allocation7 [shape = 'f32[8,16]{1,0:T(8,128)}', space=vmem, size = 0x1000, scoped, tag = 'scratch operand']
  #allocation8 [shape = 'f32[8,64]{1,0:T(8,128)}', space=vmem, size = 0x1000, scoped, tag = 'scratch operand']
  %s0 = inlined_call_operand.hbm [shape: f32[2,8,32], index: 0, kind: input, shape index: {}]
  %s1 = inlined_call_operand.hbm [shape: f32[1,32], index: 1, kind: input, shape index: {}]
  %s2 = inlined_call_operand.hbm [shape: bf16[32,64], index: 2, kind: input, shape index: {}]
  %s3 = inlined_call_operand.hbm [shape: bf16[32,64], index: 3, kind: input, shape index: {}]
  %s4 = inlined_call_operand.hbm [shape: f32[4,64], index: 4, kind: input, shape index: {}]
  %s5 = inlined_call_operand.hbm [shape: f32[1,64], index: 5, kind: input, shape index: {}]
  %s6 = inlined_call_operand.hbm [shape: bf16[64,2], index: 6, kind: input, shape index: {}]
  %s7 = inlined_call_operand.hbm [shape: bf16[64,16], index: 7, kind: input, shape index: {}]
  %s8 = inlined_call_operand.hbm [shape: bf16[64,16], index: 8, kind: input, shape index: {}]
  %s9 = inlined_call_operand.hbm [shape: bf16[2,64], index: 9, kind: input, shape index: {}]
  %s10 = inlined_call_operand.hbm [shape: f32[1,64], index: 10, kind: input, shape index: {}]
  %s11 = inlined_call_operand.hbm [shape: f32[16,64], index: 11, kind: input, shape index: {}]
  %s12 = inlined_call_operand.hbm [shape: f32[1,64], index: 12, kind: input, shape index: {}]
  %s13 = inlined_call_operand.hbm [shape: bf16[64,32], index: 13, kind: input, shape index: {}]
  %s14 = inlined_call_operand.hbm [shape: f32[2,8,32], index: 14, kind: output, shape index: {}]
  %s15 = sld [smem:[#allocation0]]
  $region149: #{tpu_custom_call.1} parent=0
    _
  %s17 = ssub.s32 1, %s15
  %s18 = scalar_select 0, %s17, %s15
  $region1: #{tpu_custom_call.1} parent=0
    #allocation9 [shape = 'u8[8192]{0}', space=vmem, size = 0x2000, scoped, tag = 'input window, operand 0']
    #allocation10 [shape = 's32[2]{0}', space=sflag, size = 0x8, scoped, tag = 'scoped memory for tpu_custom_call.1']
    #allocation11 [shape = 's32[2]{0}', space=sflag, size = 0x8, scoped, tag = 'scoped memory for tpu_custom_call.1']
    #allocation12 [shape = 'u8[512]{0}', space=vmem, size = 0x400, scoped, tag = 'input window, operand 1, single buffered']
    #allocation13 [shape = 's32[1]{0}', space=sflag, size = 0x4, scoped, tag = 'scoped memory for tpu_custom_call.1']
    #allocation14 [shape = 'u8[8192]{0}', space=vmem, size = 0x2000, scoped, tag = 'input window, operand 2, single buffered']
    #allocation15 [shape = 'u8[8192]{0}', space=vmem, size = 0x2000, scoped, tag = 'input window, operand 3, single buffered']
    #allocation16 [shape = 's32[1]{0}', space=sflag, size = 0x4, scoped, tag = 'scoped memory for tpu_custom_call.1']
    #allocation17 [shape = 'u8[2048]{0}', space=vmem, size = 0x800, scoped, tag = 'input window, operand 4, single buffered']
    #allocation18 [shape = 'u8[512]{0}', space=vmem, size = 0x400, scoped, tag = 'input window, operand 5, single buffered']
    #allocation19 [shape = 's32[1]{0}', space=sflag, size = 0x4, scoped, tag = 'scoped memory for tpu_custom_call.1']
    #allocation20 [shape = 'u8[16384]{0}', space=vmem, size = 0x4000, scoped, tag = 'input window, operand 6, single buffered']
    #allocation21 [shape = 'u8[16384]{0}', space=vmem, size = 0x4000, scoped, tag = 'input window, operand 7, single buffered']
    #allocation22 [shape = 's32[1]{0}', space=sflag, size = 0x4, scoped, tag = 'scoped memory for tpu_custom_call.1']
    #allocation23 [shape = 'u8[16384]{0}', space=vmem, size = 0x4000, scoped, tag = 'input window, operand 8, single buffered']
    #allocation24 [shape = 'u8[512]{0}', space=vmem, size = 0x400, scoped, tag = 'input window, operand 9, single buffered']
    #allocation25 [shape = 's32[1]{0}', space=sflag, size = 0x4, scoped, tag = 'scoped memory for tpu_custom_call.1']
    #allocation26 [shape = 'u8[512]{0}', space=vmem, size = 0x400, scoped, tag = 'input window, operand 10, single buffered']
    #allocation27 [shape = 'u8[8192]{0}', space=vmem, size = 0x2000, scoped, tag = 'input window, operand 11, single buffered']
    #allocation28 [shape = 's32[1]{0}', space=sflag, size = 0x4, scoped, tag = 'scoped memory for tpu_custom_call.1']
    #allocation29 [shape = 'u8[512]{0}', space=vmem, size = 0x400, scoped, tag = 'input window, operand 12, single buffered']
    #allocation30 [shape = 'u8[16384]{0}', space=vmem, size = 0x4000, scoped, tag = 'input window, operand 13, single buffered']
    #allocation31 [shape = 's32[1]{0}', space=sflag, size = 0x4, scoped, tag = 'scoped memory for tpu_custom_call.1']
    #allocation32 [shape = 'u8[8192]{0}', space=vmem, size = 0x2000, scoped, tag = 'output window, operand 0']
    %19 = vsyncpa [#allocation10], 0
    %s20 = scalar_lea.sflag [#allocation10], 1
    %21 = vsyncpa %s20, 0
    %22 = vsyncpa [#allocation13], 0
    %23 = vsyncpa [#allocation16], 0
    %24 = vsyncpa [#allocation19], 0
    %25 = vsyncpa [#allocation22], 0
    %26 = vsyncpa [#allocation25], 0
    %27 = vsyncpa [#allocation28], 0
    %28 = vsyncpa [#allocation31], 0
    %29 = vsyncpa [#allocation11], 0
    %s30 = scalar_lea.sflag [#allocation11], 1
    %31 = vsyncpa %s30, 0
    loop: start=0, step=1, limit=4
    $region2: #{tpu_custom_call.1} parent=1 // loop_pre_header
      _
    $region3: #{tpu_custom_call.1} parent=1 // loop_header
      %s33 = sphi 0, %s37
      %p34 = scmp.ge.s32.totalorder %s33, 4
      %s40 = sphi 0, %s52
      %s41 = sphi 0, %s48
      %s42 = sphi 0, %s40
      %s43 = sphi 0, %s41
      %s44 = sphi 0, %s42
      %s45 = sphi 0, %s43
      %s57 = sphi 0, %s59
      %s60 = sphi 0, %s57
      %s61 = sphi 0, %s60
      %s77 = sphi 0, %s61
      %s81 = sphi 0, %s81
      %s83 = sphi 0, %s81
      %s84 = sphi 0, %s83
      %s98 = sphi 0, %s84
      %s102 = sphi 0, %s102
      %s104 = sphi 0, %s102
      %s105 = sphi 0, %s104
      %s119 = sphi 0, %s105
      %s123 = sphi 0, %s123
      %s125 = sphi 0, %s123
      %s126 = sphi 0, %s125
      %s140 = sphi 0, %s126
      %s144 = sphi 0, %s144
      %s146 = sphi 0, %s144
      %s147 = sphi 0, %s146
      %s161 = sphi 0, %s147
      %s165 = sphi 0, %s165
      %s167 = sphi 0, %s165
      %s168 = sphi 0, %s167
      %s182 = sphi 0, %s168
      %s186 = sphi 0, %s186
      %s188 = sphi 0, %s186
      %s189 = sphi 0, %s188
      %s203 = sphi 0, %s189
      %s207 = sphi 0, %s207
      %s209 = sphi 0, %s207
      %s210 = sphi 0, %s209
      %s224 = sphi 0, %s210
      %s228 = sphi 0, %s228
      %s230 = sphi 0, %s228
      %s231 = sphi 0, %s230
      %s245 = sphi 0, %s231
      %s249 = sphi 0, %s249
      %s251 = sphi 0, %s249
      %s252 = sphi 0, %s251
      %s266 = sphi 0, %s252
      %s270 = sphi 0, %s270
      %s272 = sphi 0, %s270
      %s273 = sphi 0, %s272
      %s287 = sphi 0, %s273
      %s291 = sphi 0, %s291
      %s293 = sphi 0, %s291
      %s294 = sphi 0, %s293
      %s308 = sphi 0, %s294
      %s312 = sphi 0, %s312
      %s314 = sphi 0, %s312
      %s315 = sphi 0, %s314
      %s329 = sphi 0, %s315
      %s333 = sphi 0, %s333
      %s335 = sphi 0, %s333
      %s336 = sphi 0, %s335
      %s350 = sphi 0, %s336
      %s358 = sphi 0, %s360
      %s361 = sphi 0, %s358
      %s362 = sphi 0, %s361
      %s378 = sphi 0, %s362
    $region4: #{tpu_custom_call.1} parent=1 // loop_header_branch
      %36 = sbr.rel (%p34) target = $region8
    $region5: #{tpu_custom_call.1} parent=1 // loop_body
      %s38 = ssub.s32 %s33, 1
      %s39 = ssub.s32 %s33, 2
      %s46 = sadd.s32 1, %s41
      %p47 = scmp.ge.s32.totalorder %s46, 1
      %s48 = scalar_select %p47, 0, %s46
      %s49 = sadd.s32 1, %s40
      %s50 = scalar_select %p47, %s49, %s40
      %p51 = scmp.ge.s32.totalorder %s50, 2
      %s52 = scalar_select %p51, 0, %s50
      %s53 = ssub.s32 %s40, %s52
      %s54 = ssub.s32 %s41, %s48
      %s55 = sor.u32 %s53, %s54
      %p56 = scmp.eq.s32.totalorder %s55, 0
      %s58 = sadd.s32 %s57, 1
      %s59 = scalar_select %p56, %s57, %s58
      %p62 = pneg %p56
      %p63 = scmp.eq.s32.totalorder %s33, 1
      %p64 = por %p62, %p63
      %p65 = scmp.ne.s32.totalorder %s57, %s60
      %p66 = scmp.eq.s32.totalorder %s33, 0
      %p67 = por %p65, %p66
      %p68 = scmp.ne.s32.totalorder %s57, %s60
      %p69 = scmp.eq.s32.totalorder %s38, 1
      %p70 = por %p68, %p69
      %p71 = scmp.ne.s32.totalorder %s60, %s61
      %p72 = scmp.eq.s32.totalorder %s38, 0
      %p73 = por %p71, %p72
      %p74 = scmp.ne.s32.totalorder %s60, %s61
      %p75 = scmp.eq.s32.totalorder %s39, 1
      %p76 = por %p74, %p75
      %p78 = scmp.ne.s32.totalorder %s61, %s77
      %p79 = scmp.eq.s32.totalorder %s39, 0
      %p80 = por %p78, %p79
      %s82 = sadd.s32 %s81, 1
      %p85 = scmp.eq.s32.totalorder %s33, 1
      %p86 = scmp.ne.s32.totalorder %s81, %s83
      %p87 = scmp.eq.s32.totalorder %s33, 0
      %p88 = por %p86, %p87
      %p89 = scmp.ne.s32.totalorder %s81, %s83
      %p90 = scmp.eq.s32.totalorder %s38, 1
      %p91 = por %p89, %p90
      %p92 = scmp.ne.s32.totalorder %s83, %s84
      %p93 = scmp.eq.s32.totalorder %s38, 0
      %p94 = por %p92, %p93
      %p95 = scmp.ne.s32.totalorder %s83, %s84
      %p96 = scmp.eq.s32.totalorder %s39, 1
      %p97 = por %p95, %p96
      %p99 = scmp.ne.s32.totalorder %s84, %s98
      %p100 = scmp.eq.s32.totalorder %s39, 0
      %p101 = por %p99, %p100
      %s103 = sadd.s32 %s102, 1
      %p106 = scmp.eq.s32.totalorder %s33, 1
      %p107 = scmp.ne.s32.totalorder %s102, %s104
      %p108 = scmp.eq.s32.totalorder %s33, 0
      %p109 = por %p107, %p108
      %p110 = scmp.ne.s32.totalorder %s102, %s104
      %p111 = scmp.eq.s32.totalorder %s38, 1
      %p112 = por %p110, %p111
      %p113 = scmp.ne.s32.totalorder %s104, %s105
      %p114 = scmp.eq.s32.totalorder %s38, 0
      %p115 = por %p113, %p114
      %p116 = scmp.ne.s32.totalorder %s104, %s105
      %p117 = scmp.eq.s32.totalorder %s39, 1
      %p118 = por %p116, %p117
      %p120 = scmp.ne.s32.totalorder %s105, %s119
      %p121 = scmp.eq.s32.totalorder %s39, 0
      %p122 = por %p120, %p121
      %s124 = sadd.s32 %s123, 1
      %p127 = scmp.eq.s32.totalorder %s33, 1
      %p128 = scmp.ne.s32.totalorder %s123, %s125
      %p129 = scmp.eq.s32.totalorder %s33, 0
      %p130 = por %p128, %p129
      %p131 = scmp.ne.s32.totalorder %s123, %s125
      %p132 = scmp.eq.s32.totalorder %s38, 1
      %p133 = por %p131, %p132
      %p134 = scmp.ne.s32.totalorder %s125, %s126
      %p135 = scmp.eq.s32.totalorder %s38, 0
      %p136 = por %p134, %p135
      %p137 = scmp.ne.s32.totalorder %s125, %s126
      %p138 = scmp.eq.s32.totalorder %s39, 1
      %p139 = por %p137, %p138
      %p141 = scmp.ne.s32.totalorder %s126, %s140
      %p142 = scmp.eq.s32.totalorder %s39, 0
      %p143 = por %p141, %p142
      %s145 = sadd.s32 %s144, 1
      %p148 = scmp.eq.s32.totalorder %s33, 1
      %p149 = scmp.ne.s32.totalorder %s144, %s146
      %p150 = scmp.eq.s32.totalorder %s33, 0
      %p151 = por %p149, %p150
      %p152 = scmp.ne.s32.totalorder %s144, %s146
      %p153 = scmp.eq.s32.totalorder %s38, 1
      %p154 = por %p152, %p153
      %p155 = scmp.ne.s32.totalorder %s146, %s147
      %p156 = scmp.eq.s32.totalorder %s38, 0
      %p157 = por %p155, %p156
      %p158 = scmp.ne.s32.totalorder %s146, %s147
      %p159 = scmp.eq.s32.totalorder %s39, 1
      %p160 = por %p158, %p159
      %p162 = scmp.ne.s32.totalorder %s147, %s161
      %p163 = scmp.eq.s32.totalorder %s39, 0
      %p164 = por %p162, %p163
      %s166 = sadd.s32 %s165, 1
      %p169 = scmp.eq.s32.totalorder %s33, 1
      %p170 = scmp.ne.s32.totalorder %s165, %s167
      %p171 = scmp.eq.s32.totalorder %s33, 0
      %p172 = por %p170, %p171
      %p173 = scmp.ne.s32.totalorder %s165, %s167
      %p174 = scmp.eq.s32.totalorder %s38, 1
      %p175 = por %p173, %p174
      %p176 = scmp.ne.s32.totalorder %s167, %s168
      %p177 = scmp.eq.s32.totalorder %s38, 0
      %p178 = por %p176, %p177
      %p179 = scmp.ne.s32.totalorder %s167, %s168
      %p180 = scmp.eq.s32.totalorder %s39, 1
      %p181 = por %p179, %p180
      %p183 = scmp.ne.s32.totalorder %s168, %s182
      %p184 = scmp.eq.s32.totalorder %s39, 0
      %p185 = por %p183, %p184
      %s187 = sadd.s32 %s186, 1
      %p190 = scmp.eq.s32.totalorder %s33, 1
      %p191 = scmp.ne.s32.totalorder %s186, %s188
      %p192 = scmp.eq.s32.totalorder %s33, 0
      %p193 = por %p191, %p192
      %p194 = scmp.ne.s32.totalorder %s186, %s188
      %p195 = scmp.eq.s32.totalorder %s38, 1
      %p196 = por %p194, %p195
      %p197 = scmp.ne.s32.totalorder %s188, %s189
      %p198 = scmp.eq.s32.totalorder %s38, 0
      %p199 = por %p197, %p198
      %p200 = scmp.ne.s32.totalorder %s188, %s189
      %p201 = scmp.eq.s32.totalorder %s39, 1
      %p202 = por %p200, %p201
      %p204 = scmp.ne.s32.totalorder %s189, %s203
      %p205 = scmp.eq.s32.totalorder %s39, 0
      %p206 = por %p204, %p205
      %s208 = sadd.s32 %s207, 1
      %p211 = scmp.eq.s32.totalorder %s33, 1
      %p212 = scmp.ne.s32.totalorder %s207, %s209
      %p213 = scmp.eq.s32.totalorder %s33, 0
      %p214 = por %p212, %p213
      %p215 = scmp.ne.s32.totalorder %s207, %s209
      %p216 = scmp.eq.s32.totalorder %s38, 1
      %p217 = por %p215, %p216
      %p218 = scmp.ne.s32.totalorder %s209, %s210
      %p219 = scmp.eq.s32.totalorder %s38, 0
      %p220 = por %p218, %p219
      %p221 = scmp.ne.s32.totalorder %s209, %s210
      %p222 = scmp.eq.s32.totalorder %s39, 1
      %p223 = por %p221, %p222
      %p225 = scmp.ne.s32.totalorder %s210, %s224
      %p226 = scmp.eq.s32.totalorder %s39, 0
      %p227 = por %p225, %p226
      %s229 = sadd.s32 %s228, 1
      %p232 = scmp.eq.s32.totalorder %s33, 1
      %p233 = scmp.ne.s32.totalorder %s228, %s230
      %p234 = scmp.eq.s32.totalorder %s33, 0
      %p235 = por %p233, %p234
      %p236 = scmp.ne.s32.totalorder %s228, %s230
      %p237 = scmp.eq.s32.totalorder %s38, 1
      %p238 = por %p236, %p237
      %p239 = scmp.ne.s32.totalorder %s230, %s231
      %p240 = scmp.eq.s32.totalorder %s38, 0
      %p241 = por %p239, %p240
      %p242 = scmp.ne.s32.totalorder %s230, %s231
      %p243 = scmp.eq.s32.totalorder %s39, 1
      %p244 = por %p242, %p243
      %p246 = scmp.ne.s32.totalorder %s231, %s245
      %p247 = scmp.eq.s32.totalorder %s39, 0
      %p248 = por %p246, %p247
      %s250 = sadd.s32 %s249, 1
      %p253 = scmp.eq.s32.totalorder %s33, 1
      %p254 = scmp.ne.s32.totalorder %s249, %s251
      %p255 = scmp.eq.s32.totalorder %s33, 0
      %p256 = por %p254, %p255
      %p257 = scmp.ne.s32.totalorder %s249, %s251
      %p258 = scmp.eq.s32.totalorder %s38, 1
      %p259 = por %p257, %p258
      %p260 = scmp.ne.s32.totalorder %s251, %s252
      %p261 = scmp.eq.s32.totalorder %s38, 0
      %p262 = por %p260, %p261
      %p263 = scmp.ne.s32.totalorder %s251, %s252
      %p264 = scmp.eq.s32.totalorder %s39, 1
      %p265 = por %p263, %p264
      %p267 = scmp.ne.s32.totalorder %s252, %s266
      %p268 = scmp.eq.s32.totalorder %s39, 0
      %p269 = por %p267, %p268
      %s271 = sadd.s32 %s270, 1
      %p274 = scmp.eq.s32.totalorder %s33, 1
      %p275 = scmp.ne.s32.totalorder %s270, %s272
      %p276 = scmp.eq.s32.totalorder %s33, 0
      %p277 = por %p275, %p276
      %p278 = scmp.ne.s32.totalorder %s270, %s272
      %p279 = scmp.eq.s32.totalorder %s38, 1
      %p280 = por %p278, %p279
      %p281 = scmp.ne.s32.totalorder %s272, %s273
      %p282 = scmp.eq.s32.totalorder %s38, 0
      %p283 = por %p281, %p282
      %p284 = scmp.ne.s32.totalorder %s272, %s273
      %p285 = scmp.eq.s32.totalorder %s39, 1
      %p286 = por %p284, %p285
      %p288 = scmp.ne.s32.totalorder %s273, %s287
      %p289 = scmp.eq.s32.totalorder %s39, 0
      %p290 = por %p288, %p289
      %s292 = sadd.s32 %s291, 1
      %p295 = scmp.eq.s32.totalorder %s33, 1
      %p296 = scmp.ne.s32.totalorder %s291, %s293
      %p297 = scmp.eq.s32.totalorder %s33, 0
      %p298 = por %p296, %p297
      %p299 = scmp.ne.s32.totalorder %s291, %s293
      %p300 = scmp.eq.s32.totalorder %s38, 1
      %p301 = por %p299, %p300
      %p302 = scmp.ne.s32.totalorder %s293, %s294
      %p303 = scmp.eq.s32.totalorder %s38, 0
      %p304 = por %p302, %p303
      %p305 = scmp.ne.s32.totalorder %s293, %s294
      %p306 = scmp.eq.s32.totalorder %s39, 1
      %p307 = por %p305, %p306
      %p309 = scmp.ne.s32.totalorder %s294, %s308
      %p310 = scmp.eq.s32.totalorder %s39, 0
      %p311 = por %p309, %p310
      %s313 = sadd.s32 %s312, 1
      %p316 = scmp.eq.s32.totalorder %s33, 1
      %p317 = scmp.ne.s32.totalorder %s312, %s314
      %p318 = scmp.eq.s32.totalorder %s33, 0
      %p319 = por %p317, %p318
      %p320 = scmp.ne.s32.totalorder %s312, %s314
      %p321 = scmp.eq.s32.totalorder %s38, 1
      %p322 = por %p320, %p321
      %p323 = scmp.ne.s32.totalorder %s314, %s315
      %p324 = scmp.eq.s32.totalorder %s38, 0
      %p325 = por %p323, %p324
      %p326 = scmp.ne.s32.totalorder %s314, %s315
      %p327 = scmp.eq.s32.totalorder %s39, 1
      %p328 = por %p326, %p327
      %p330 = scmp.ne.s32.totalorder %s315, %s329
      %p331 = scmp.eq.s32.totalorder %s39, 0
      %p332 = por %p330, %p331
      %s334 = sadd.s32 %s333, 1
      %p337 = scmp.eq.s32.totalorder %s33, 1
      %p338 = scmp.ne.s32.totalorder %s333, %s335
      %p339 = scmp.eq.s32.totalorder %s33, 0
      %p340 = por %p338, %p339
      %p341 = scmp.ne.s32.totalorder %s333, %s335
      %p342 = scmp.eq.s32.totalorder %s38, 1
      %p343 = por %p341, %p342
      %p344 = scmp.ne.s32.totalorder %s335, %s336
      %p345 = scmp.eq.s32.totalorder %s38, 0
      %p346 = por %p344, %p345
      %p347 = scmp.ne.s32.totalorder %s335, %s336
      %p348 = scmp.eq.s32.totalorder %s39, 1
      %p349 = por %p347, %p348
      %p351 = scmp.ne.s32.totalorder %s336, %s350
      %p352 = scmp.eq.s32.totalorder %s39, 0
      %p353 = por %p351, %p352
      %s354 = ssub.s32 %s40, %s52
      %s355 = ssub.s32 %s41, %s48
      %s356 = sor.u32 %s354, %s355
      %p357 = scmp.eq.s32.totalorder %s356, 0
      %s359 = sadd.s32 %s358, 1
      %s360 = scalar_select %p357, %s358, %s359
      %p363 = pneg %p357
      %p364 = scmp.eq.s32.totalorder %s33, 1
      %p365 = por %p363, %p364
      %p366 = scmp.ne.s32.totalorder %s358, %s361
      %p367 = scmp.eq.s32.totalorder %s33, 0
      %p368 = por %p366, %p367
      %p369 = scmp.ne.s32.totalorder %s358, %s361
      %p370 = scmp.eq.s32.totalorder %s38, 1
      %p371 = por %p369, %p370
      %p372 = scmp.ne.s32.totalorder %s361, %s362
      %p373 = scmp.eq.s32.totalorder %s38, 0
      %p374 = por %p372, %p373
      %p375 = scmp.ne.s32.totalorder %s361, %s362
      %p376 = scmp.eq.s32.totalorder %s39, 1
      %p377 = por %p375, %p376
      %p379 = scmp.ne.s32.totalorder %s362, %s378
      %p380 = scmp.eq.s32.totalorder %s39, 0
      %p381 = por %p379, %p380
      %p382 = scmp.le.s32.totalorder 1, %s33
      %p383 = scmp.lt.s32.totalorder %s33, 3
      %p384 = pnand %p382, %p383
      %p385 = pneg %p384
      // Predicated region
      $region9: #{tpu_custom_call.1} parent=5 // pred_check
        _
      $region10: #{tpu_custom_call.1} parent=5 // pred_check_branch
        %387 = sbr.rel (%p384) target = $region12
      $region11: #{tpu_custom_call.1} parent=5 // pred_region
        %s388 = ssub.s32 %s33, 1
        // Predicated region
        $region13: #{tpu_custom_call.1} parent=11 // pred_check
          %p389 = pneg %p94
        $region14: #{tpu_custom_call.1} parent=11 // pred_check_branch
          %391 = sbr.rel (%p389) target = $region16
        $region15: #{tpu_custom_call.1} parent=11 // pred_region
          %s393 = ssub.s32 16, 16
          %394 = vsyncadd [#allocation13], %s393
          %s396 = sshll.u32 [#allocation12], 4
          %s397 = int_to_ptr.vmem [resolvable:$true] %s396
          %399 = dma.hbm_to_vmem [thread:$0]  %s1, 16, %s397, [#allocation13]
        $region16: #{tpu_custom_call.1} parent=11 // pred_fallthru
          _
        // Predicated region
        $region17: #{tpu_custom_call.1} parent=11 // pred_check
          %p400 = pneg %p115
        $region18: #{tpu_custom_call.1} parent=11 // pred_check_branch
          %402 = sbr.rel (%p400) target = $region20
        $region19: #{tpu_custom_call.1} parent=11 // pred_region
          %s404 = ssub.s32 256, 256
          %405 = vsyncadd [#allocation13], %s404
          %s406 = sshll.u32 [#allocation14], 4
          %s407 = int_to_ptr.vmem [resolvable:$true] %s406
          %412 = dma.hbm_to_vmem [thread:$0]  %s2, 256, %s407, [#allocation13], 64, 64, 4
        $region20: #{tpu_custom_call.1} parent=11 // pred_fallthru
          _
        // Predicated region
        $region21: #{tpu_custom_call.1} parent=11 // pred_check
          %p413 = pneg %p136
        $region22: #{tpu_custom_call.1} parent=11 // pred_check_branch
          %415 = sbr.rel (%p413) target = $region24
        $region23: #{tpu_custom_call.1} parent=11 // pred_region
          %s417 = ssub.s32 256, 256
          %418 = vsyncadd [#allocation16], %s417
          %s419 = sshll.u32 [#allocation15], 4
          %s420 = int_to_ptr.vmem [resolvable:$true] %s419
          %425 = dma.hbm_to_vmem [thread:$0]  %s3, 256, %s420, [#allocation16], 64, 64, 4
        $region24: #{tpu_custom_call.1} parent=11 // pred_fallthru
          _
        // Predicated region
        $region25: #{tpu_custom_call.1} parent=11 // pred_check
          %p426 = pneg %p157
        $region26: #{tpu_custom_call.1} parent=11 // pred_check_branch
          %428 = sbr.rel (%p426) target = $region28
        $region27: #{tpu_custom_call.1} parent=11 // pred_region
          %s430 = ssub.s32 64, 64
          %431 = vsyncadd [#allocation16], %s430
          %s433 = sshll.u32 [#allocation17], 4
          %s434 = int_to_ptr.vmem [resolvable:$true] %s433
          %436 = dma.hbm_to_vmem [thread:$0]  %s4, 64, %s434, [#allocation16]
        $region28: #{tpu_custom_call.1} parent=11 // pred_fallthru
          _
        // Predicated region
        $region29: #{tpu_custom_call.1} parent=11 // pred_check
          %p437 = pneg %p178
        $region30: #{tpu_custom_call.1} parent=11 // pred_check_branch
          %439 = sbr.rel (%p437) target = $region32
        $region31: #{tpu_custom_call.1} parent=11 // pred_region
          %s441 = ssub.s32 16, 16
          %442 = vsyncadd [#allocation19], %s441
          %s444 = sshll.u32 [#allocation18], 4
          %s445 = int_to_ptr.vmem [resolvable:$true] %s444
          %447 = dma.hbm_to_vmem [thread:$0]  %s5, 16, %s445, [#allocation19]
        $region32: #{tpu_custom_call.1} parent=11 // pred_fallthru
          _
        // Predicated region
        $region33: #{tpu_custom_call.1} parent=11 // pred_check
          %p448 = pneg %p199
        $region34: #{tpu_custom_call.1} parent=11 // pred_check_branch
          %450 = sbr.rel (%p448) target = $region36
        $region35: #{tpu_custom_call.1} parent=11 // pred_region
          %s452 = ssub.s32 512, 512
          %453 = vsyncadd [#allocation19], %s452
          %s454 = sshll.u32 [#allocation20], 4
          %s455 = int_to_ptr.vmem [resolvable:$true] %s454
          %460 = dma.hbm_to_vmem [thread:$0]  %s6, 512, %s455, [#allocation19], 64, 64, 4
        $region36: #{tpu_custom_call.1} parent=11 // pred_fallthru
          _
        // Predicated region
        $region37: #{tpu_custom_call.1} parent=11 // pred_check
          %p461 = pneg %p220
        $region38: #{tpu_custom_call.1} parent=11 // pred_check_branch
          %463 = sbr.rel (%p461) target = $region40
        $region39: #{tpu_custom_call.1} parent=11 // pred_region
          %s465 = ssub.s32 512, 512
          %466 = vsyncadd [#allocation22], %s465
          %s467 = sshll.u32 [#allocation21], 4
          %s468 = int_to_ptr.vmem [resolvable:$true] %s467
          %473 = dma.hbm_to_vmem [thread:$0]  %s7, 512, %s468, [#allocation22], 64, 64, 4
        $region40: #{tpu_custom_call.1} parent=11 // pred_fallthru
          _
        // Predicated region
        $region41: #{tpu_custom_call.1} parent=11 // pred_check
          %p474 = pneg %p241
        $region42: #{tpu_custom_call.1} parent=11 // pred_check_branch
          %476 = sbr.rel (%p474) target = $region44
        $region43: #{tpu_custom_call.1} parent=11 // pred_region
          %s478 = ssub.s32 512, 512
          %479 = vsyncadd [#allocation22], %s478
          %s480 = sshll.u32 [#allocation23], 4
          %s481 = int_to_ptr.vmem [resolvable:$true] %s480
          %486 = dma.hbm_to_vmem [thread:$0]  %s8, 512, %s481, [#allocation22], 64, 64, 4
        $region44: #{tpu_custom_call.1} parent=11 // pred_fallthru
          _
        // Predicated region
        $region45: #{tpu_custom_call.1} parent=11 // pred_check
          %p487 = pneg %p262
        $region46: #{tpu_custom_call.1} parent=11 // pred_check_branch
          %489 = sbr.rel (%p487) target = $region48
        $region47: #{tpu_custom_call.1} parent=11 // pred_region
          %s491 = ssub.s32 16, 16
          %492 = vsyncadd [#allocation25], %s491
          %s494 = sshll.u32 [#allocation24], 4
          %s495 = int_to_ptr.vmem [resolvable:$true] %s494
          %497 = dma.hbm_to_vmem [thread:$0]  %s9, 16, %s495, [#allocation25]
        $region48: #{tpu_custom_call.1} parent=11 // pred_fallthru
          _
        // Predicated region
        $region49: #{tpu_custom_call.1} parent=11 // pred_check
          %p498 = pneg %p283
        $region50: #{tpu_custom_call.1} parent=11 // pred_check_branch
          %500 = sbr.rel (%p498) target = $region52
        $region51: #{tpu_custom_call.1} parent=11 // pred_region
          %s502 = ssub.s32 16, 16
          %503 = vsyncadd [#allocation25], %s502
          %s505 = sshll.u32 [#allocation26], 4
          %s506 = int_to_ptr.vmem [resolvable:$true] %s505
          %508 = dma.hbm_to_vmem [thread:$0]  %s10, 16, %s506, [#allocation25]
        $region52: #{tpu_custom_call.1} parent=11 // pred_fallthru
          _
        // Predicated region
        $region53: #{tpu_custom_call.1} parent=11 // pred_check
          %p509 = pneg %p304
        $region54: #{tpu_custom_call.1} parent=11 // pred_check_branch
          %511 = sbr.rel (%p509) target = $region56
        $region55: #{tpu_custom_call.1} parent=11 // pred_region
          %s513 = ssub.s32 256, 256
          %514 = vsyncadd [#allocation28], %s513
          %s515 = sshll.u32 [#allocation27], 4
          %s516 = int_to_ptr.vmem [resolvable:$true] %s515
          %521 = dma.hbm_to_vmem [thread:$0]  %s11, 256, %s516, [#allocation28], 128, 128, 8
        $region56: #{tpu_custom_call.1} parent=11 // pred_fallthru
          _
        // Predicated region
        $region57: #{tpu_custom_call.1} parent=11 // pred_check
          %p522 = pneg %p325
        $region58: #{tpu_custom_call.1} parent=11 // pred_check_branch
          %524 = sbr.rel (%p522) target = $region60
        $region59: #{tpu_custom_call.1} parent=11 // pred_region
          %s526 = ssub.s32 16, 16
          %527 = vsyncadd [#allocation28], %s526
          %s529 = sshll.u32 [#allocation29], 4
          %s530 = int_to_ptr.vmem [resolvable:$true] %s529
          %532 = dma.hbm_to_vmem [thread:$0]  %s12, 16, %s530, [#allocation28]
        $region60: #{tpu_custom_call.1} parent=11 // pred_fallthru
          _
        // Predicated region
        $region61: #{tpu_custom_call.1} parent=11 // pred_check
          %p533 = pneg %p346
        $region62: #{tpu_custom_call.1} parent=11 // pred_check_branch
          %535 = sbr.rel (%p533) target = $region64
        $region63: #{tpu_custom_call.1} parent=11 // pred_region
          %s537 = ssub.s32 512, 512
          %538 = vsyncadd [#allocation31], %s537
          %s539 = sshll.u32 [#allocation30], 4
          %s540 = int_to_ptr.vmem [resolvable:$true] %s539
          %545 = dma.hbm_to_vmem [thread:$0]  %s13, 512, %s540, [#allocation31], 64, 64, 4
        $region64: #{tpu_custom_call.1} parent=11 // pred_fallthru
          _
      $region12: #{tpu_custom_call.1} parent=5 // pred_fallthru
        _
      %p546 = scmp.lt.s32.totalorder %s33, 2
      // Predicated region
      $region65: #{tpu_custom_call.1} parent=5 // pred_check
        %p547 = pneg %p546
      $region66: #{tpu_custom_call.1} parent=5 // pred_check_branch
        %549 = sbr.rel (%p547) target = $region68
      $region67: #{tpu_custom_call.1} parent=5 // pred_region
        // Predicated region
        $region69: #{tpu_custom_call.1} parent=67 // pred_check
          %p550 = pneg %p67
        $region70: #{tpu_custom_call.1} parent=67 // pred_check_branch
          %552 = sbr.rel (%p550) target = $region72
        $region71: #{tpu_custom_call.1} parent=67 // pred_region
          %s553 = sand.u32 %s57, 1
          %s554 = scalar_lea.sflag [#allocation10], %s553
          %s555 = sand.u32 %s57, 1
          %s556 = smul.addr %s555, 8
          %s557 = scalar_lea.vmem [#allocation9], %s556
          %s559 = ssub.s32 128, 128
          %560 = vsyncadd %s554, %s559
          %s561 = sadd.s32 %s41, %s40
          %s562 = smul.addr %s561, 128
          %s563 = scalar_lea.hbm %s0, %s562
          %s565 = sshll.u32 %s557, 4
          %s566 = int_to_ptr.vmem [resolvable:$true] %s565
          %568 = dma.hbm_to_vmem [thread:$0]  %s563, 128, %s566, %s554
        $region72: #{tpu_custom_call.1} parent=67 // pred_fallthru
          _
      $region68: #{tpu_custom_call.1} parent=5 // pred_fallthru
        _
      %p569 = scmp.le.s32.totalorder 1, %s33
      %p570 = scmp.lt.s32.totalorder %s33, 3
      %p571 = pnand %p569, %p570
      %p572 = pneg %p571
      // Predicated region
      $region73: #{tpu_custom_call.1} parent=5 // pred_check
        _
      $region74: #{tpu_custom_call.1} parent=5 // pred_check_branch
        %574 = sbr.rel (%p571) target = $region76
      $region75: #{tpu_custom_call.1} parent=5 // pred_region
        %s575 = ssub.s32 %s33, 1
        %s576 = sand.u32 %s60, 1
        %s577 = scalar_lea.sflag [#allocation10], %s576
        %s578 = sand.u32 %s60, 1
        %s579 = smul.addr %s578, 8
        %s580 = scalar_lea.vmem [#allocation9], %s579
        // Predicated region
        $region77: #{tpu_custom_call.1} parent=75 // pred_check
          %p581 = pneg %p73
        $region78: #{tpu_custom_call.1} parent=75 // pred_check_branch
          %583 = sbr.rel (%p581) target = $region80
        $region79: #{tpu_custom_call.1} parent=75 // pred_region
          %584 = dma.done %s577, 128
        $region80: #{tpu_custom_call.1} parent=75 // pred_fallthru
          _
        // Predicated region
        $region81: #{tpu_custom_call.1} parent=75 // pred_check
          %p585 = pneg %p94
        $region82: #{tpu_custom_call.1} parent=75 // pred_check_branch
          %587 = sbr.rel (%p585) target = $region84
        $region83: #{tpu_custom_call.1} parent=75 // pred_region
          %588 = dma.done [#allocation13], 16
        $region84: #{tpu_custom_call.1} parent=75 // pred_fallthru
          _
        // Predicated region
        $region85: #{tpu_custom_call.1} parent=75 // pred_check
          %p589 = pneg %p115
        $region86: #{tpu_custom_call.1} parent=75 // pred_check_branch
          %591 = sbr.rel (%p589) target = $region88
        $region87: #{tpu_custom_call.1} parent=75 // pred_region
          %592 = dma.done [#allocation13], 256
        $region88: #{tpu_custom_call.1} parent=75 // pred_fallthru
          _
        // Predicated region
        $region89: #{tpu_custom_call.1} parent=75 // pred_check
          %p593 = pneg %p136
        $region90: #{tpu_custom_call.1} parent=75 // pred_check_branch
          %595 = sbr.rel (%p593) target = $region92
        $region91: #{tpu_custom_call.1} parent=75 // pred_region
          %596 = dma.done [#allocation16], 256
        $region92: #{tpu_custom_call.1} parent=75 // pred_fallthru
          _
        // Predicated region
        $region93: #{tpu_custom_call.1} parent=75 // pred_check
          %p597 = pneg %p157
        $region94: #{tpu_custom_call.1} parent=75 // pred_check_branch
          %599 = sbr.rel (%p597) target = $region96
        $region95: #{tpu_custom_call.1} parent=75 // pred_region
          %600 = dma.done [#allocation16], 64
        $region96: #{tpu_custom_call.1} parent=75 // pred_fallthru
          _
        // Predicated region
        $region97: #{tpu_custom_call.1} parent=75 // pred_check
          %p601 = pneg %p178
        $region98: #{tpu_custom_call.1} parent=75 // pred_check_branch
          %603 = sbr.rel (%p601) target = $region100
        $region99: #{tpu_custom_call.1} parent=75 // pred_region
          %604 = dma.done [#allocation19], 16
        $region100: #{tpu_custom_call.1} parent=75 // pred_fallthru
          _
        // Predicated region
        $region101: #{tpu_custom_call.1} parent=75 // pred_check
          %p605 = pneg %p199
        $region102: #{tpu_custom_call.1} parent=75 // pred_check_branch
          %607 = sbr.rel (%p605) target = $region104
        $region103: #{tpu_custom_call.1} parent=75 // pred_region
          %608 = dma.done [#allocation19], 512
        $region104: #{tpu_custom_call.1} parent=75 // pred_fallthru
          _
        // Predicated region
        $region105: #{tpu_custom_call.1} parent=75 // pred_check
          %p609 = pneg %p220
        $region106: #{tpu_custom_call.1} parent=75 // pred_check_branch
          %611 = sbr.rel (%p609) target = $region108
        $region107: #{tpu_custom_call.1} parent=75 // pred_region
          %612 = dma.done [#allocation22], 512
        $region108: #{tpu_custom_call.1} parent=75 // pred_fallthru
          _
        // Predicated region
        $region109: #{tpu_custom_call.1} parent=75 // pred_check
          %p613 = pneg %p241
        $region110: #{tpu_custom_call.1} parent=75 // pred_check_branch
          %615 = sbr.rel (%p613) target = $region112
        $region111: #{tpu_custom_call.1} parent=75 // pred_region
          %616 = dma.done [#allocation22], 512
        $region112: #{tpu_custom_call.1} parent=75 // pred_fallthru
          _
        // Predicated region
        $region113: #{tpu_custom_call.1} parent=75 // pred_check
          %p617 = pneg %p262
        $region114: #{tpu_custom_call.1} parent=75 // pred_check_branch
          %619 = sbr.rel (%p617) target = $region116
        $region115: #{tpu_custom_call.1} parent=75 // pred_region
          %620 = dma.done [#allocation25], 16
        $region116: #{tpu_custom_call.1} parent=75 // pred_fallthru
          _
        // Predicated region
        $region117: #{tpu_custom_call.1} parent=75 // pred_check
          %p621 = pneg %p283
        $region118: #{tpu_custom_call.1} parent=75 // pred_check_branch
          %623 = sbr.rel (%p621) target = $region120
        $region119: #{tpu_custom_call.1} parent=75 // pred_region
          %624 = dma.done [#allocation25], 16
        $region120: #{tpu_custom_call.1} parent=75 // pred_fallthru
          _
        // Predicated region
        $region121: #{tpu_custom_call.1} parent=75 // pred_check
          %p625 = pneg %p304
        $region122: #{tpu_custom_call.1} parent=75 // pred_check_branch
          %627 = sbr.rel (%p625) target = $region124
        $region123: #{tpu_custom_call.1} parent=75 // pred_region
          %628 = dma.done [#allocation28], 256
        $region124: #{tpu_custom_call.1} parent=75 // pred_fallthru
          _
        // Predicated region
        $region125: #{tpu_custom_call.1} parent=75 // pred_check
          %p629 = pneg %p325
        $region126: #{tpu_custom_call.1} parent=75 // pred_check_branch
          %631 = sbr.rel (%p629) target = $region128
        $region127: #{tpu_custom_call.1} parent=75 // pred_region
          %632 = dma.done [#allocation28], 16
        $region128: #{tpu_custom_call.1} parent=75 // pred_fallthru
          _
        // Predicated region
        $region129: #{tpu_custom_call.1} parent=75 // pred_check
          %p633 = pneg %p346
        $region130: #{tpu_custom_call.1} parent=75 // pred_check_branch
          %635 = sbr.rel (%p633) target = $region132
        $region131: #{tpu_custom_call.1} parent=75 // pred_region
          %636 = dma.done [#allocation31], 512
        $region132: #{tpu_custom_call.1} parent=75 // pred_fallthru
          _
        %s637 = sand.u32 %s60, 1
        %s638 = scalar_lea.sflag [#allocation10], %s637
        %s639 = sand.u32 %s60, 1
        %s640 = smul.addr %s639, 8
        %s641 = scalar_lea.vmem [#allocation9], %s640
        %p642 = pneg %p73
        %p643 = pneg %p70
        %p644 = pneg %p94
        %p645 = pneg %p91
        %p646 = pneg %p115
        %p647 = pneg %p112
        %p648 = pneg %p136
        %p649 = pneg %p133
        %p650 = pneg %p157
        %p651 = pneg %p154
        %p652 = pneg %p178
        %p653 = pneg %p175
        %p654 = pneg %p199
        %p655 = pneg %p196
        %p656 = pneg %p220
        %p657 = pneg %p217
        %p658 = pneg %p241
        %p659 = pneg %p238
        %p660 = pneg %p262
        %p661 = pneg %p259
        %p662 = pneg %p283
        %p663 = pneg %p280
        %p664 = pneg %p304
        %p665 = pneg %p301
        %p666 = pneg %p325
        %p667 = pneg %p322
        %p668 = pneg %p346
        %p669 = pneg %p343
        %p670 = pneg %p374
        %p671 = pneg %p371
        %s672 = sand.u32 %s361, 1
        %s673 = scalar_lea.sflag [#allocation11], %s672
        %s674 = sand.u32 %s361, 1
        %s675 = smul.addr %s674, 8
        %s676 = scalar_lea.vmem [#allocation32], %s675
        %p678 = scmp.eq.s32.totalorder %s43, 0
        // Predicated region
        $region133: #{tpu_custom_call.1} parent=75 // pred_check
          %p679 = pneg %p678
        $region134: #{tpu_custom_call.1} parent=75 // pred_check_branch
          %681 = sbr.rel (%p679) target = $region136
        $region135: #{tpu_custom_call.1} parent=75 // pred_region
          %vm682 = vcmask 523264
          %683 = vst.msk [vmem:[#allocation2] sm:$0xff] %vm682, 0.0
          %684 = vst.msk [vmem:[#allocation2 + $0x8] sm:$0xff] %vm682, 0.0
          %vm685 = vcmask 518144
          %686 = vst.msk [vmem:[#allocation3 + $0x5] sm:$0x7] %vm685, 0.0
        $region136: #{tpu_custom_call.1} parent=75 // pred_fallthru
          _
        %v687 = vld [vmem:[%s580] sm:$0xff]
        %v688 = vmul.f32 %v687, %v687
        %vm689 = vcmask 261120
        %v690 = vsel %vm689, %v688, 0.0
        %691 = vadd.xlane.f32.xlu0 %v690
        %v692 = vpop.xlane.xlu0 %691
        %v693 = vrcp.pop 32.0
        %v694 = vmul.f32 %v692, %v693
        %v695 = vadd.f32 %v694, 1e-05
        %v696 = vrsqrt.pop %v695
        %v697 = vmul.f32 %v687, %v696
        %v698 = vld [vmem:[#allocation12] sm:$0x1]
        %v700 = vlaneseq
        %v701 = vshrl.u32 %v700, 7
        %v702 = vsub.s32 0, %v701
        %v703 = vrot.slane %v698, %v702
        %v705 = vmul.f32 %v697, %v703
        %v706 = vpack.c.bf16 %v705, %v705
        %v707 = vld [vmem:[#allocation14] sm:$0xf]
        %v708 = vld [vmem:[#allocation14 + $0x4] sm:$0xf]
        %v709 = vld [vmem:[#allocation14 + $0x8] sm:$0xf]
        %v710 = vld [vmem:[#allocation14 + $0xc] sm:$0xf]
        %v715 = vunpack.c.l.b16 %v707
        %v716 = vunpack.c.l.b16 %v708
        %v717 = vunpack.c.l.b16 %v709
        %v718 = vunpack.c.l.b16 %v710
        %v719 = vpack.c.b16 %v716, %v715
        %v720 = vpack.c.b16 %v718, %v717
        %v724 = vsel %vm689, %v706, 0
        %726 = vmatprep.subr.bf16.mxu0 0
        %727 = vmatpush1.bf16.msra.mxu0 %v719
        %728 = vmatprep.subr.bf16.mxu0 0
        %729 = vmatpush1.bf16.msra.mxu0 %v720
        %730 = vmatprep.subr.bf16.mxu0 0
        %731 = vmatpush1.bf16.msra.mxu0 0
        %732 = vmatprep.subr.bf16.mxu0 0
        %733 = vmatpush1.bf16.msra.mxu0 0
        %734 = vmatprep.subr.bf16.mxu0 0
        %735 = vmatpush1.bf16.msra.mxu0 0
        %736 = vmatprep.subr.bf16.mxu0 0
        %737 = vmatpush1.bf16.msra.mxu0 0
        %738 = vmatprep.subr.bf16.mxu0 0
        %739 = vmatpush1.bf16.msra.mxu0 0
        %740 = vmatprep.subr.bf16.mxu0 0
        %741 = vmatpush1.bf16.msra.mxu0 0
        %742 = vmatprep.subr.bf16.mxu0 0
        %743 = vmatpush1.bf16.msra.mxu0 0
        %744 = vmatprep.subr.bf16.mxu0 0
        %745 = vmatpush1.bf16.msra.mxu0 0
        %746 = vmatprep.subr.bf16.mxu0 0
        %747 = vmatpush1.bf16.msra.mxu0 0
        %748 = vmatprep.subr.bf16.mxu0 0
        %749 = vmatpush1.bf16.msra.mxu0 0
        %750 = vmatprep.subr.bf16.mxu0 0
        %751 = vmatpush1.bf16.msra.mxu0 0
        %752 = vmatprep.subr.bf16.mxu0 0
        %753 = vmatpush1.bf16.msra.mxu0 0
        %754 = vmatprep.subr.bf16.mxu0 0
        %755 = vmatpush1.bf16.msra.mxu0 0
        %756 = vmatprep.subr.bf16.mxu0 0
        %757 = vmatpush1.bf16.msra.mxu0 0
        %758 = vmatprep.mubr.bf16.mxu0 0
        %759 = vmatmul.mubr.bf16.gmra.mrb[0].mxu0 %v724
        %v760 = vpop.f32.mrb[0].mxu0
        %v761 = vadd.f32 0.0, %v760
        %v762 = vpop.f32.mrb[0].mxu0
        %v763 = vpop.f32.mrb[0].mxu0
        %v764 = vpop.f32.mrb[0].mxu0
        %765 = vdwg.mxu0
        %v766 = vld [vmem:[#allocation15] sm:$0xf]
        %v767 = vld [vmem:[#allocation15 + $0x4] sm:$0xf]
        %v768 = vld [vmem:[#allocation15 + $0x8] sm:$0xf]
        %v769 = vld [vmem:[#allocation15 + $0xc] sm:$0xf]
        %v774 = vunpack.c.l.b16 %v766
        %v775 = vunpack.c.l.b16 %v767
        %v776 = vunpack.c.l.b16 %v768
        %v777 = vunpack.c.l.b16 %v769
        %v778 = vpack.c.b16 %v775, %v774
        %v779 = vpack.c.b16 %v777, %v776
        %782 = vmatprep.subr.bf16.mxu0 0
        %783 = vmatpush1.bf16.msra.mxu0 %v778
        %784 = vmatprep.subr.bf16.mxu0 0
        %785 = vmatpush1.bf16.msra.mxu0 %v779
        %786 = vmatprep.subr.bf16.mxu0 0
        %787 = vmatpush1.bf16.msra.mxu0 0
        %788 = vmatprep.subr.bf16.mxu0 0
        %789 = vmatpush1.bf16.msra.mxu0 0
        %790 = vmatprep.subr.bf16.mxu0 0
        %791 = vmatpush1.bf16.msra.mxu0 0
        %792 = vmatprep.subr.bf16.mxu0 0
        %793 = vmatpush1.bf16.msra.mxu0 0
        %794 = vmatprep.subr.bf16.mxu0 0
        %795 = vmatpush1.bf16.msra.mxu0 0
        %796 = vmatprep.subr.bf16.mxu0 0
        %797 = vmatpush1.bf16.msra.mxu0 0
        %798 = vmatprep.subr.bf16.mxu0 0
        %799 = vmatpush1.bf16.msra.mxu0 0
        %800 = vmatprep.subr.bf16.mxu0 0
        %801 = vmatpush1.bf16.msra.mxu0 0
        %802 = vmatprep.subr.bf16.mxu0 0
        %803 = vmatpush1.bf16.msra.mxu0 0
        %804 = vmatprep.subr.bf16.mxu0 0
        %805 = vmatpush1.bf16.msra.mxu0 0
        %806 = vmatprep.subr.bf16.mxu0 0
        %807 = vmatpush1.bf16.msra.mxu0 0
        %808 = vmatprep.subr.bf16.mxu0 0
        %809 = vmatpush1.bf16.msra.mxu0 0
        %810 = vmatprep.subr.bf16.mxu0 0
        %811 = vmatpush1.bf16.msra.mxu0 0
        %812 = vmatprep.subr.bf16.mxu0 0
        %813 = vmatpush1.bf16.msra.mxu0 0
        %814 = vmatprep.mubr.bf16.mxu0 0
        %815 = vmatmul.mubr.bf16.gmra.mrb[0].mxu0 %v724
        %v816 = vpop.f32.mrb[0].mxu0
        %v817 = vadd.f32 0.0, %v816
        %v818 = vpop.f32.mrb[0].mxu0
        %v819 = vpop.f32.mrb[0].mxu0
        %v820 = vpop.f32.mrb[0].mxu0
        %821 = vdwg.mxu0
        %vm822 = vcmask 523264
        %823 = vst.msk [vmem:[#allocation3 + $0x8] sm:$0xff] %vm822, %v761
        %v824 = vld [vmem:[#allocation17] sm:$0xf]
        %v825 = vld [vmem:[#allocation18] sm:$0x1]
        %v826 = vld [vmem:[#allocation3 + $0x5] sm:$0xff]
        %v827 = vlaneseq
        %v828 = vshrl.u32 %v827, 7
        %v829 = vsub.s32 0, %v828
        %v830 = vrot.slane %v824, %v829
        %v831 = vmul.f32 %v826, %v830
        %v833 = vlaneseq
        %v834 = vshrl.u32 %v833, 7
        %v835 = vsub.s32 0, %v834
        %v836 = vrot.slane %v825, %v835
        %v838 = vadd.f32 %v836, %v831
        %v839 = vld [vmem:[#allocation3 + $0x6] sm:$0xff]
        %v840 = vlaneseq
        %v841 = vshrl.u32 %v840, 7
        %v842 = vsub.s32 1, %v841
        %v843 = vrot.slane %v824, %v842
        %v844 = vmul.f32 %v839, %v843
        %v845 = vadd.f32 %v838, %v844
        %v846 = vld [vmem:[#allocation3 + $0x7] sm:$0xff]
        %v847 = vlaneseq
        %v848 = vshrl.u32 %v847, 7
        %v849 = vsub.s32 2, %v848
        %v850 = vrot.slane %v824, %v849
        %v851 = vmul.f32 %v846, %v850
        %v852 = vadd.f32 %v845, %v851
        %v853 = vld [vmem:[#allocation3 + $0x8] sm:$0xff]
        %v854 = vlaneseq
        %v855 = vshrl.u32 %v854, 7
        %v856 = vsub.s32 3, %v855
        %v857 = vrot.slane %v824, %v856
        %v858 = vmul.f32 %v853, %v857
        %v859 = vadd.f32 %v852, %v858
        %vm860 = vcmask 523269
        %861 = vst.msk [vmem:[#allocation3] sm:$0xe0] %vm860, %v761
        %v862 = vsub.f32 0.0, %v859
        %v863 = vmul.f32 %v862, 1.442695
        %v864 = vpow.pop %v863
        %v865 = vadd.f32 %v864, 1.0
        %v866 = vrcp.pop %v865
        %v867 = vmul.f32 1.0, %v866
        %v868 = vmul.f32 %v859, %v867
        %v869 = vpack.c.bf16 %v868, %v868
        %v870 = vld [vmem:[#allocation20] sm:$0xf]
        %v871 = vld [vmem:[#allocation20 + $0x4] sm:$0xf]
        %v872 = vld [vmem:[#allocation20 + $0x8] sm:$0xf]
        %v873 = vld [vmem:[#allocation20 + $0xc] sm:$0xf]
        %v874 = vld [vmem:[#allocation20 + $0x10] sm:$0xf]
        %v875 = vld [vmem:[#allocation20 + $0x14] sm:$0xf]
        %v876 = vld [vmem:[#allocation20 + $0x18] sm:$0xf]
        %v877 = vld [vmem:[#allocation20 + $0x1c] sm:$0xf]
        %v886 = vunpack.c.l.b16 %v870
        %v887 = vunpack.c.l.b16 %v871
        %v888 = vunpack.c.l.b16 %v872
        %v889 = vunpack.c.l.b16 %v873
        %v890 = vunpack.c.l.b16 %v874
        %v891 = vunpack.c.l.b16 %v875
        %v892 = vunpack.c.l.b16 %v876
        %v893 = vunpack.c.l.b16 %v877
        %v894 = vpack.c.b16 %v887, %v886
        %v895 = vpack.c.b16 %v889, %v888
        %v896 = vpack.c.b16 %v891, %v890
        %v897 = vpack.c.b16 %v893, %v892
        %v903 = vsel %vm822, %v869, 0
        %905 = vmatprep.subr.bf16.mxu0 0
        %906 = vmatpush1.bf16.msra.mxu0 %v894
        %907 = vmatprep.subr.bf16.mxu0 0
        %908 = vmatpush1.bf16.msra.mxu0 %v895
        %909 = vmatprep.subr.bf16.mxu0 0
        %910 = vmatpush1.bf16.msra.mxu0 %v896
        %911 = vmatprep.subr.bf16.mxu0 0
        %912 = vmatpush1.bf16.msra.mxu0 %v897
        %913 = vmatprep.subr.bf16.mxu0 0
        %914 = vmatpush1.bf16.msra.mxu0 0
        %915 = vmatprep.subr.bf16.mxu0 0
        %916 = vmatpush1.bf16.msra.mxu0 0
        %917 = vmatprep.subr.bf16.mxu0 0
        %918 = vmatpush1.bf16.msra.mxu0 0
        %919 = vmatprep.subr.bf16.mxu0 0
        %920 = vmatpush1.bf16.msra.mxu0 0
        %921 = vmatprep.subr.bf16.mxu0 0
        %922 = vmatpush1.bf16.msra.mxu0 0
        %923 = vmatprep.subr.bf16.mxu0 0
        %924 = vmatpush1.bf16.msra.mxu0 0
        %925 = vmatprep.subr.bf16.mxu0 0
        %926 = vmatpush1.bf16.msra.mxu0 0
        %927 = vmatprep.subr.bf16.mxu0 0
        %928 = vmatpush1.bf16.msra.mxu0 0
        %929 = vmatprep.subr.bf16.mxu0 0
        %930 = vmatpush1.bf16.msra.mxu0 0
        %931 = vmatprep.subr.bf16.mxu0 0
        %932 = vmatpush1.bf16.msra.mxu0 0
        %933 = vmatprep.subr.bf16.mxu0 0
        %934 = vmatpush1.bf16.msra.mxu0 0
        %935 = vmatprep.subr.bf16.mxu0 0
        %936 = vmatpush1.bf16.msra.mxu0 0
        %937 = vmatprep.mubr.bf16.mxu0 0
        %938 = vmatmul.mubr.bf16.gmra.mrb[0].mxu0 %v903
        %v939 = vpop.f32.mrb[0].mxu0
        %v940 = vadd.f32 0.0, %v939
        %v941 = vpop.f32.mrb[0].mxu0
        %v942 = vpop.f32.mrb[0].mxu0
        %v943 = vpop.f32.mrb[0].mxu0
        %944 = vdwg.mxu0
        %v945 = vld [vmem:[#allocation21] sm:$0xf]
        %v946 = vld [vmem:[#allocation21 + $0x4] sm:$0xf]
        %v947 = vld [vmem:[#allocation21 + $0x8] sm:$0xf]
        %v948 = vld [vmem:[#allocation21 + $0xc] sm:$0xf]
        %v949 = vld [vmem:[#allocation21 + $0x10] sm:$0xf]
        %v950 = vld [vmem:[#allocation21 + $0x14] sm:$0xf]
        %v951 = vld [vmem:[#allocation21 + $0x18] sm:$0xf]
        %v952 = vld [vmem:[#allocation21 + $0x1c] sm:$0xf]
        %v961 = vunpack.c.l.b16 %v945
        %v962 = vunpack.c.l.b16 %v946
        %v963 = vunpack.c.l.b16 %v947
        %v964 = vunpack.c.l.b16 %v948
        %v965 = vunpack.c.l.b16 %v949
        %v966 = vunpack.c.l.b16 %v950
        %v967 = vunpack.c.l.b16 %v951
        %v968 = vunpack.c.l.b16 %v952
        %v969 = vpack.c.b16 %v962, %v961
        %v970 = vpack.c.b16 %v964, %v963
        %v971 = vpack.c.b16 %v966, %v965
        %v972 = vpack.c.b16 %v968, %v967
        %977 = vmatprep.subr.bf16.mxu0 0
        %978 = vmatpush1.bf16.msra.mxu0 %v969
        %979 = vmatprep.subr.bf16.mxu0 0
        %980 = vmatpush1.bf16.msra.mxu0 %v970
        %981 = vmatprep.subr.bf16.mxu0 0
        %982 = vmatpush1.bf16.msra.mxu0 %v971
        %983 = vmatprep.subr.bf16.mxu0 0
        %984 = vmatpush1.bf16.msra.mxu0 %v972
        %985 = vmatprep.subr.bf16.mxu0 0
        %986 = vmatpush1.bf16.msra.mxu0 0
        %987 = vmatprep.subr.bf16.mxu0 0
        %988 = vmatpush1.bf16.msra.mxu0 0
        %989 = vmatprep.subr.bf16.mxu0 0
        %990 = vmatpush1.bf16.msra.mxu0 0
        %991 = vmatprep.subr.bf16.mxu0 0
        %992 = vmatpush1.bf16.msra.mxu0 0
        %993 = vmatprep.subr.bf16.mxu0 0
        %994 = vmatpush1.bf16.msra.mxu0 0
        %995 = vmatprep.subr.bf16.mxu0 0
        %996 = vmatpush1.bf16.msra.mxu0 0
        %997 = vmatprep.subr.bf16.mxu0 0
        %998 = vmatpush1.bf16.msra.mxu0 0
        %999 = vmatprep.subr.bf16.mxu0 0
        %1000 = vmatpush1.bf16.msra.mxu0 0
        %1001 = vmatprep.subr.bf16.mxu0 0
        %1002 = vmatpush1.bf16.msra.mxu0 0
        %1003 = vmatprep.subr.bf16.mxu0 0
        %1004 = vmatpush1.bf16.msra.mxu0 0
        %1005 = vmatprep.subr.bf16.mxu0 0
        %1006 = vmatpush1.bf16.msra.mxu0 0
        %1007 = vmatprep.subr.bf16.mxu0 0
        %1008 = vmatpush1.bf16.msra.mxu0 0
        %1009 = vmatprep.mubr.bf16.mxu0 0
        %1010 = vmatmul.mubr.bf16.gmra.mrb[0].mxu0 %v903
        %v1011 = vpop.f32.mrb[0].mxu0
        %v1012 = vadd.f32 0.0, %v1011
        %v1013 = vpop.f32.mrb[0].mxu0
        %v1014 = vpop.f32.mrb[0].mxu0
        %v1015 = vpop.f32.mrb[0].mxu0
        %1016 = vdwg.mxu0
        %v1017 = vld [vmem:[#allocation23] sm:$0xf]
        %v1018 = vld [vmem:[#allocation23 + $0x4] sm:$0xf]
        %v1019 = vld [vmem:[#allocation23 + $0x8] sm:$0xf]
        %v1020 = vld [vmem:[#allocation23 + $0xc] sm:$0xf]
        %v1021 = vld [vmem:[#allocation23 + $0x10] sm:$0xf]
        %v1022 = vld [vmem:[#allocation23 + $0x14] sm:$0xf]
        %v1023 = vld [vmem:[#allocation23 + $0x18] sm:$0xf]
        %v1024 = vld [vmem:[#allocation23 + $0x1c] sm:$0xf]
        %v1033 = vunpack.c.l.b16 %v1017
        %v1034 = vunpack.c.l.b16 %v1018
        %v1035 = vunpack.c.l.b16 %v1019
        %v1036 = vunpack.c.l.b16 %v1020
        %v1037 = vunpack.c.l.b16 %v1021
        %v1038 = vunpack.c.l.b16 %v1022
        %v1039 = vunpack.c.l.b16 %v1023
        %v1040 = vunpack.c.l.b16 %v1024
        %v1041 = vpack.c.b16 %v1034, %v1033
        %v1042 = vpack.c.b16 %v1036, %v1035
        %v1043 = vpack.c.b16 %v1038, %v1037
        %v1044 = vpack.c.b16 %v1040, %v1039
        %1049 = vmatprep.subr.bf16.mxu0 0
        %1050 = vmatpush1.bf16.msra.mxu0 %v1041
        %1051 = vmatprep.subr.bf16.mxu0 0
        %1052 = vmatpush1.bf16.msra.mxu0 %v1042
        %1053 = vmatprep.subr.bf16.mxu0 0
        %1054 = vmatpush1.bf16.msra.mxu0 %v1043
        %1055 = vmatprep.subr.bf16.mxu0 0
        %1056 = vmatpush1.bf16.msra.mxu0 %v1044
        %1057 = vmatprep.subr.bf16.mxu0 0
        %1058 = vmatpush1.bf16.msra.mxu0 0
        %1059 = vmatprep.subr.bf16.mxu0 0
        %1060 = vmatpush1.bf16.msra.mxu0 0
        %1061 = vmatprep.subr.bf16.mxu0 0
        %1062 = vmatpush1.bf16.msra.mxu0 0
        %1063 = vmatprep.subr.bf16.mxu0 0
        %1064 = vmatpush1.bf16.msra.mxu0 0
        %1065 = vmatprep.subr.bf16.mxu0 0
        %1066 = vmatpush1.bf16.msra.mxu0 0
        %1067 = vmatprep.subr.bf16.mxu0 0
        %1068 = vmatpush1.bf16.msra.mxu0 0
        %1069 = vmatprep.subr.bf16.mxu0 0
        %1070 = vmatpush1.bf16.msra.mxu0 0
        %1071 = vmatprep.subr.bf16.mxu0 0
        %1072 = vmatpush1.bf16.msra.mxu0 0
        %1073 = vmatprep.subr.bf16.mxu0 0
        %1074 = vmatpush1.bf16.msra.mxu0 0
        %1075 = vmatprep.subr.bf16.mxu0 0
        %1076 = vmatpush1.bf16.msra.mxu0 0
        %1077 = vmatprep.subr.bf16.mxu0 0
        %1078 = vmatpush1.bf16.msra.mxu0 0
        %1079 = vmatprep.subr.bf16.mxu0 0
        %1080 = vmatpush1.bf16.msra.mxu0 0
        %1081 = vmatprep.mubr.bf16.mxu0 0
        %1082 = vmatmul.mubr.bf16.gmra.mrb[0].mxu0 %v903
        %v1083 = vpop.f32.mrb[0].mxu0
        %v1084 = vadd.f32 0.0, %v1083
        %v1085 = vpop.f32.mrb[0].mxu0
        %v1086 = vpop.f32.mrb[0].mxu0
        %v1087 = vpop.f32.mrb[0].mxu0
        %1088 = vdwg.mxu0
        %v1089 = vpack.c.bf16 %v940, %v940
        %v1090 = vld [vmem:[#allocation24] sm:$0x1]
        %v1091 = vld [vmem:[#allocation26] sm:$0x1]
        %v1093 = vlaneseq
        %v1094 = vshrl.u32 %v1093, 7
        %v1095 = vsub.s32 0, %v1094
        %v1096 = vrot.slane %v1091, %v1095
        %vm1098 = vcmask 15360
        %v1100 = vsel %vm1098, %v1089, 0
        %vm1102 = vcmask 1040384
        %v1104 = vsel %vm1102, %v1090, 0
        %1106 = vmatprep.subr.bf16.mxu0 0
        %1107 = vmatpush1.bf16.msra.mxu0 %v1104
        %1108 = vmatprep.subr.bf16.mxu0 0
        %1109 = vmatpush1.bf16.msra.mxu0 0
        %1110 = vmatprep.subr.bf16.mxu0 0
        %1111 = vmatpush1.bf16.msra.mxu0 0
        %1112 = vmatprep.subr.bf16.mxu0 0
        %1113 = vmatpush1.bf16.msra.mxu0 0
        %1114 = vmatprep.subr.bf16.mxu0 0
        %1115 = vmatpush1.bf16.msra.mxu0 0
        %1116 = vmatprep.subr.bf16.mxu0 0
        %1117 = vmatpush1.bf16.msra.mxu0 0
        %1118 = vmatprep.subr.bf16.mxu0 0
        %1119 = vmatpush1.bf16.msra.mxu0 0
        %1120 = vmatprep.subr.bf16.mxu0 0
        %1121 = vmatpush1.bf16.msra.mxu0 0
        %1122 = vmatprep.subr.bf16.mxu0 0
        %1123 = vmatpush1.bf16.msra.mxu0 0
        %1124 = vmatprep.subr.bf16.mxu0 0
        %1125 = vmatpush1.bf16.msra.mxu0 0
        %1126 = vmatprep.subr.bf16.mxu0 0
        %1127 = vmatpush1.bf16.msra.mxu0 0
        %1128 = vmatprep.subr.bf16.mxu0 0
        %1129 = vmatpush1.bf16.msra.mxu0 0
        %1130 = vmatprep.subr.bf16.mxu0 0
        %1131 = vmatpush1.bf16.msra.mxu0 0
        %1132 = vmatprep.subr.bf16.mxu0 0
        %1133 = vmatpush1.bf16.msra.mxu0 0
        %1134 = vmatprep.subr.bf16.mxu0 0
        %1135 = vmatpush1.bf16.msra.mxu0 0
        %1136 = vmatprep.subr.bf16.mxu0 0
        %1137 = vmatpush1.bf16.msra.mxu0 0
        %1138 = vmatprep.mubr.bf16.mxu0 0
        %1139 = vmatmul.mubr.bf16.gmra.mrb[0].mxu0 %v1100
        %v1140 = vpop.f32.mrb[0].mxu0
        %v1141 = vadd.f32 %v1096, %v1140
        %v1142 = vpop.f32.mrb[0].mxu0
        %v1143 = vpop.f32.mrb[0].mxu0
        %v1144 = vpop.f32.mrb[0].mxu0
        %1145 = vdwg.mxu0
        %v1146 = vmax.f32 %v1141, 0.0
        %v1147 = vand.u32 2147483647, %v1141
        %v1148 = vsub.f32 0.0, %v1147
        %v1149 = vmul.f32 %v1148, 1.442695
        %v1150 = vpow.pop %v1149
        %v1151 = vadd.f32 %v1150, 1.0
        %v1152 = vlog2.pop %v1151
        %v1153 = vmul.f32 %v1152, 0.6931472
        %v1154 = vmul.f32 -0.5, %v1150
        %v1155 = vadd.f32 %v1154, 1.0
        %v1156 = vmul.f32 %v1155, %v1150
        %v1157 = vand.u32 2147483647, %v1150
        %vm1158 = vcmp.lt.f32.partialorder %v1157, 0.0004427343
        %v1159 = vsel %vm1158, %v1156, %v1153
        %v1160 = vadd.f32 %v1146, %v1159
        %1161 = vst.msk [vmem:[#allocation4] sm:$0xff] %vm822, %v1160
        %1162 = vst.msk [vmem:[#allocation5] sm:$0xff] %vm822, %v868
        %vm1163 = vcmask 130048
        %1164 = vst.msk [vmem:[#allocation6] sm:$0xff] %vm1163, %v1012
        %1165 = vst.msk [vmem:[#allocation7] sm:$0xff] %vm1163, %v1084
        %v1166 = vld [vmem:[#allocation27] sm:$0xff]
        %v1167 = vld [vmem:[#allocation27 + $0x8] sm:$0xff]
        %v1168 = vmul.f32 %v1166, 1.442695
        %v1169 = vpow.pop %v1168
        %v1170 = vmul.f32 %v1167, 1.442695
        %v1171 = vpow.pop %v1170
        %v1172 = vsub.f32 0.0, %v1169
        %v1173 = vsub.f32 0.0, %v1171
        %v1174 = vld [vmem:[#allocation29] sm:$0x1]
        %v1175 = vlaneseq
        %v1176 = vshrl.u32 %v1175, 7
        %v1177 = vadd.s32 %v1176, 8
        %v1178 = vlaneseq
        %v1179 = vand.u32 %v1178, 127
        %vm1180 = vcmp.eq.s32.totalorder %v1176, %v1179
        %vm1181 = vcmp.eq.s32.totalorder %v1177, %v1179
        %v1182 = vsel %vm1180, 1, 0
        %v1183 = vsel %vm1181, 1, 0
        %v1184 = vcvt.s32.f32 %v1182
        %v1185 = vcvt.s32.f32 %v1183
        %v1186 = vld [vmem:[#allocation4] sm:$0xff]
        %v1187 = vld [vmem:[#allocation5] sm:$0xff]
        %v1188 = vld [vmem:[#allocation6] sm:$0xff]
        %v1189 = vld [vmem:[#allocation7] sm:$0xff]
        %v1190 = vmul.f32 %v1186, %v1187
        %v1192 = vsel %vm1163, %v1184, 0
        %v1195 = vsel %vm1163, %v1185, 0
        %v1198 = vsel %vm1163, %v1188, 0
        %1200 = vmatprep.subr.mxu0 0.0
        %1201 = vmatpush1.xpose.msra.mxu0 %v1198
        %1202 = vmatprep.subr.mxu0 0.0
        %1203 = vmatpush1.xpose.msra.mxu0 0.0
        %1204 = vmatprep.subr.mxu0 0.0
        %1205 = vmatpush1.xpose.msra.mxu0 0.0
        %1206 = vmatprep.subr.mxu0 0.0
        %1207 = vmatpush1.xpose.msra.mxu0 0.0
        %1208 = vmatprep.subr.mxu0 0.0
        %1209 = vmatpush1.xpose.msra.mxu0 0.0
        %1210 = vmatprep.subr.mxu0 0.0
        %1211 = vmatpush1.xpose.msra.mxu0 0.0
        %1212 = vmatprep.subr.mxu0 0.0
        %1213 = vmatpush1.xpose.msra.mxu0 0.0
        %1214 = vmatprep.subr.mxu0 0.0
        %1215 = vmatpush1.xpose.msra.mxu0 0.0
        %1216 = vmatprep.subr.mxu0 0.0
        %1217 = vmatpush1.xpose.msra.mxu0 0.0
        %1218 = vmatprep.subr.mxu0 0.0
        %1219 = vmatpush1.xpose.msra.mxu0 0.0
        %1220 = vmatprep.subr.mxu0 0.0
        %1221 = vmatpush1.xpose.msra.mxu0 0.0
        %1222 = vmatprep.subr.mxu0 0.0
        %1223 = vmatpush1.xpose.msra.mxu0 0.0
        %1224 = vmatprep.subr.mxu0 0.0
        %1225 = vmatpush1.xpose.msra.mxu0 0.0
        %1226 = vmatprep.subr.mxu0 0.0
        %1227 = vmatpush1.xpose.msra.mxu0 0.0
        %1228 = vmatprep.subr.mxu0 0.0
        %1229 = vmatpush1.xpose.msra.mxu0 0.0
        %1230 = vmatprep.subr.mxu0 0.0
        %1231 = vmatpush1.xpose.msra.mxu0 0.0
        %1232 = vmatprep.subr.mxu0 0.0
        %1233 = vmatpush1.xpose.msra.mxu0 0.0
        %1234 = vmatprep.subr.mxu0 0.0
        %1235 = vmatpush1.xpose.msra.mxu0 0.0
        %1236 = vmatprep.subr.mxu0 0.0
        %1237 = vmatpush1.xpose.msra.mxu0 0.0
        %1238 = vmatprep.subr.mxu0 0.0
        %1239 = vmatpush1.xpose.msra.mxu0 0.0
        %1240 = vmatprep.subr.mxu0 0.0
        %1241 = vmatpush1.xpose.msra.mxu0 0.0
        %1242 = vmatprep.subr.mxu0 0.0
        %1243 = vmatpush1.xpose.msra.mxu0 0.0
        %1244 = vmatprep.subr.mxu0 0.0
        %1245 = vmatpush1.xpose.msra.mxu0 0.0
        %1246 = vmatprep.subr.mxu0 0.0
        %1247 = vmatpush1.xpose.msra.mxu0 0.0
        %1248 = vmatprep.subr.mxu0 0.0
        %1249 = vmatpush1.xpose.msra.mxu0 0.0
        %1250 = vmatprep.subr.mxu0 0.0
        %1251 = vmatpush1.xpose.msra.mxu0 0.0
        %1252 = vmatprep.subr.mxu0 0.0
        %1253 = vmatpush1.xpose.msra.mxu0 0.0
        %1254 = vmatprep.subr.mxu0 0.0
        %1255 = vmatpush1.xpose.msra.mxu0 0.0
        %1256 = vmatprep.subr.mxu0 0.0
        %1257 = vmatpush1.xpose.msra.mxu0 0.0
        %1258 = vmatprep.subr.mxu0 0.0
        %1259 = vmatpush1.xpose.msra.mxu0 0.0
        %1260 = vmatprep.subr.mxu0 0.0
        %1261 = vmatpush1.xpose.msra.mxu0 0.0
        %1262 = vmatprep.subr.mxu0 0.0
        %1263 = vmatpush1.xpose.msra.mxu0 0.0
        %1264 = vmatprep.mubr.f32.mxu0 0.0
        %1265 = vmatmul.mubr.f32.gmra.mrb[0].mxu0 %v1192
        %v1266 = vpop.f32.mrb[0].mxu0
        %v1267 = vadd.f32 0.0, %v1266
        %v1268 = vpop.f32.mrb[0].mxu0
        %1269 = vmatprep.mubr.f32.mxu0 0.0
        %1270 = vmatmul.mubr.f32.gmra.mrb[0].mxu0 %v1195
        %v1271 = vpop.f32.mrb[0].mxu0
        %v1272 = vadd.f32 0.0, %v1271
        %v1273 = vpop.f32.mrb[0].mxu0
        %1274 = vdwg.mxu0
        %v1275 = vld [vmem:[#allocation2] sm:$0xff]
        %v1276 = vld [vmem:[#allocation2 + $0x8] sm:$0xff]
        %v1277 = vlaneseq
        %v1278 = vshrl.u32 %v1277, 7
        %v1279 = vsub.s32 0, %v1278
        %v1280 = vrot.slane %v1186, %v1279
        %v1281 = vmul.f32 %v1280, %v1172
        %v1282 = vmul.f32 %v1280, %v1173
        %v1283 = vmul.f32 %v1281, 1.442695
        %v1284 = vpow.pop %v1283
        %v1285 = vmul.f32 %v1282, 1.442695
        %v1286 = vpow.pop %v1285
        %v1287 = vlaneseq
        %v1288 = vshrl.u32 %v1287, 7
        %v1289 = vsub.s32 0, %v1288
        %v1290 = vrot.slane %v1190, %v1289
        %1292 = vset.pattern.permute.xlu0 0
        %1293 = vperm.xlu0 %1292, %v1267
        %v1294 = vpop.permute.xlu0 %1293
        %1297 = vset.pattern.permute.xlu0 0
        %1298 = vperm.xlu0 %1297, %v1272
        %v1299 = vpop.permute.xlu0 %1298
        %v1301 = vmul.f32 %v1290, %v1294
        %v1302 = vmul.f32 %v1290, %v1299
        %v1303 = vmul.f32 %v1284, %v1275
        %v1304 = vmul.f32 %v1286, %v1276
        %v1305 = vadd.f32 %v1303, %v1301
        %v1306 = vadd.f32 %v1304, %v1302
        %v1308 = vsel %vm1163, %v1189, 0
        %1310 = vmatprep.subr.mxu0 0.0
        %1311 = vmatpush1.msra.mxu0 %v1305
        %1312 = vmatprep.subr.mxu0 0.0
        %1313 = vmatpush1.msra.mxu0 %v1306
        %1314 = vmatprep.subr.mxu0 0.0
        %1315 = vmatpush1.msra.mxu0 0.0
        %1316 = vmatprep.subr.mxu0 0.0
        %1317 = vmatpush1.msra.mxu0 0.0
        %1318 = vmatprep.subr.mxu0 0.0
        %1319 = vmatpush1.msra.mxu0 0.0
        %1320 = vmatprep.subr.mxu0 0.0
        %1321 = vmatpush1.msra.mxu0 0.0
        %1322 = vmatprep.subr.mxu0 0.0
        %1323 = vmatpush1.msra.mxu0 0.0
        %1324 = vmatprep.subr.mxu0 0.0
        %1325 = vmatpush1.msra.mxu0 0.0
        %1326 = vmatprep.subr.mxu0 0.0
        %1327 = vmatpush1.msra.mxu0 0.0
        %1328 = vmatprep.subr.mxu0 0.0
        %1329 = vmatpush1.msra.mxu0 0.0
        %1330 = vmatprep.subr.mxu0 0.0
        %1331 = vmatpush1.msra.mxu0 0.0
        %1332 = vmatprep.subr.mxu0 0.0
        %1333 = vmatpush1.msra.mxu0 0.0
        %1334 = vmatprep.subr.mxu0 0.0
        %1335 = vmatpush1.msra.mxu0 0.0
        %1336 = vmatprep.subr.mxu0 0.0
        %1337 = vmatpush1.msra.mxu0 0.0
        %1338 = vmatprep.subr.mxu0 0.0
        %1339 = vmatpush1.msra.mxu0 0.0
        %1340 = vmatprep.subr.mxu0 0.0
        %1341 = vmatpush1.msra.mxu0 0.0
        %1342 = vmatprep.subr.mxu0 0.0
        %1343 = vmatpush1.msra.mxu0 0.0
        %1344 = vmatprep.subr.mxu0 0.0
        %1345 = vmatpush1.msra.mxu0 0.0
        %1346 = vmatprep.subr.mxu0 0.0
        %1347 = vmatpush1.msra.mxu0 0.0
        %1348 = vmatprep.subr.mxu0 0.0
        %1349 = vmatpush1.msra.mxu0 0.0
        %1350 = vmatprep.subr.mxu0 0.0
        %1351 = vmatpush1.msra.mxu0 0.0
        %1352 = vmatprep.subr.mxu0 0.0
        %1353 = vmatpush1.msra.mxu0 0.0
        %1354 = vmatprep.subr.mxu0 0.0
        %1355 = vmatpush1.msra.mxu0 0.0
        %1356 = vmatprep.subr.mxu0 0.0
        %1357 = vmatpush1.msra.mxu0 0.0
        %1358 = vmatprep.subr.mxu0 0.0
        %1359 = vmatpush1.msra.mxu0 0.0
        %1360 = vmatprep.subr.mxu0 0.0
        %1361 = vmatpush1.msra.mxu0 0.0
        %1362 = vmatprep.subr.mxu0 0.0
        %1363 = vmatpush1.msra.mxu0 0.0
        %1364 = vmatprep.subr.mxu0 0.0
        %1365 = vmatpush1.msra.mxu0 0.0
        %1366 = vmatprep.subr.mxu0 0.0
        %1367 = vmatpush1.msra.mxu0 0.0
        %1368 = vmatprep.subr.mxu0 0.0
        %1369 = vmatpush1.msra.mxu0 0.0
        %1370 = vmatprep.subr.mxu0 0.0
        %1371 = vmatpush1.msra.mxu0 0.0
        %1372 = vmatprep.subr.mxu0 0.0
        %1373 = vmatpush1.msra.mxu0 0.0
        %1374 = vmatprep.mubr.f32.mxu0 0.0
        %1375 = vmatmul.mubr.f32.gmra.mrb[0].mxu0 %v1308
        %v1376 = vpop.f32.mrb[0].mxu0
        %v1377 = vadd.f32 0.0, %v1376
        %v1378 = vpop.f32.mrb[0].mxu0
        %1379 = vdwg.mxu0
        %v1380 = vlaneseq
        %v1381 = vshrl.u32 %v1380, 7
        %v1382 = vsub.s32 1, %v1381
        %v1383 = vrot.slane %v1186, %v1382
        %v1384 = vmul.f32 %v1383, %v1172
        %v1385 = vmul.f32 %v1383, %v1173
        %v1386 = vmul.f32 %v1384, 1.442695
        %v1387 = vpow.pop %v1386
        %v1388 = vmul.f32 %v1385, 1.442695
        %v1389 = vpow.pop %v1388
        %v1390 = vlaneseq
        %v1391 = vshrl.u32 %v1390, 7
        %v1392 = vsub.s32 1, %v1391
        %v1393 = vrot.slane %v1190, %v1392
        %1394 = vset.pattern.permute.xlu0 1
        %1395 = vperm.xlu0 %1394, %v1267
        %v1396 = vpop.permute.xlu0 %1395
        %1398 = vset.pattern.permute.xlu0 1
        %1399 = vperm.xlu0 %1398, %v1272
        %v1400 = vpop.permute.xlu0 %1399
        %v1402 = vmul.f32 %v1393, %v1396
        %v1403 = vmul.f32 %v1393, %v1400
        %v1404 = vmul.f32 %v1387, %v1305
        %v1405 = vmul.f32 %v1389, %v1306
        %v1406 = vadd.f32 %v1404, %v1402
        %v1407 = vadd.f32 %v1405, %v1403
        %v1408 = vrot.slane %v1189, 1
        %v1409 = vsel %vm1163, %v1408, 0
        %1411 = vmatprep.subr.mxu0 0.0
        %1412 = vmatpush1.msra.mxu0 %v1406
        %1413 = vmatprep.subr.mxu0 0.0
        %1414 = vmatpush1.msra.mxu0 %v1407
        %1415 = vmatprep.subr.mxu0 0.0
        %1416 = vmatpush1.msra.mxu0 0.0
        %1417 = vmatprep.subr.mxu0 0.0
        %1418 = vmatpush1.msra.mxu0 0.0
        %1419 = vmatprep.subr.mxu0 0.0
        %1420 = vmatpush1.msra.mxu0 0.0
        %1421 = vmatprep.subr.mxu0 0.0
        %1422 = vmatpush1.msra.mxu0 0.0
        %1423 = vmatprep.subr.mxu0 0.0
        %1424 = vmatpush1.msra.mxu0 0.0
        %1425 = vmatprep.subr.mxu0 0.0
        %1426 = vmatpush1.msra.mxu0 0.0
        %1427 = vmatprep.subr.mxu0 0.0
        %1428 = vmatpush1.msra.mxu0 0.0
        %1429 = vmatprep.subr.mxu0 0.0
        %1430 = vmatpush1.msra.mxu0 0.0
        %1431 = vmatprep.subr.mxu0 0.0
        %1432 = vmatpush1.msra.mxu0 0.0
        %1433 = vmatprep.subr.mxu0 0.0
        %1434 = vmatpush1.msra.mxu0 0.0
        %1435 = vmatprep.subr.mxu0 0.0
        %1436 = vmatpush1.msra.mxu0 0.0
        %1437 = vmatprep.subr.mxu0 0.0
        %1438 = vmatpush1.msra.mxu0 0.0
        %1439 = vmatprep.subr.mxu0 0.0
        %1440 = vmatpush1.msra.mxu0 0.0
        %1441 = vmatprep.subr.mxu0 0.0
        %1442 = vmatpush1.msra.mxu0 0.0
        %1443 = vmatprep.subr.mxu0 0.0
        %1444 = vmatpush1.msra.mxu0 0.0
        %1445 = vmatprep.subr.mxu0 0.0
        %1446 = vmatpush1.msra.mxu0 0.0
        %1447 = vmatprep.subr.mxu0 0.0
        %1448 = vmatpush1.msra.mxu0 0.0
        %1449 = vmatprep.subr.mxu0 0.0
        %1450 = vmatpush1.msra.mxu0 0.0
        %1451 = vmatprep.subr.mxu0 0.0
        %1452 = vmatpush1.msra.mxu0 0.0
        %1453 = vmatprep.subr.mxu0 0.0
        %1454 = vmatpush1.msra.mxu0 0.0
        %1455 = vmatprep.subr.mxu0 0.0
        %1456 = vmatpush1.msra.mxu0 0.0
        %1457 = vmatprep.subr.mxu0 0.0
        %1458 = vmatpush1.msra.mxu0 0.0
        %1459 = vmatprep.subr.mxu0 0.0
        %1460 = vmatpush1.msra.mxu0 0.0
        %1461 = vmatprep.subr.mxu0 0.0
        %1462 = vmatpush1.msra.mxu0 0.0
        %1463 = vmatprep.subr.mxu0 0.0
        %1464 = vmatpush1.msra.mxu0 0.0
        %1465 = vmatprep.subr.mxu0 0.0
        %1466 = vmatpush1.msra.mxu0 0.0
        %1467 = vmatprep.subr.mxu0 0.0
        %1468 = vmatpush1.msra.mxu0 0.0
        %1469 = vmatprep.subr.mxu0 0.0
        %1470 = vmatpush1.msra.mxu0 0.0
        %1471 = vmatprep.subr.mxu0 0.0
        %1472 = vmatpush1.msra.mxu0 0.0
        %1473 = vmatprep.subr.mxu0 0.0
        %1474 = vmatpush1.msra.mxu0 0.0
        %1475 = vmatprep.mubr.f32.mxu0 0.0
        %1476 = vmatmul.mubr.f32.gmra.mrb[0].mxu0 %v1409
        %v1477 = vpop.f32.mrb[0].mxu0
        %v1478 = vadd.f32 0.0, %v1477
        %v1479 = vpop.f32.mrb[0].mxu0
        %1480 = vdwg.mxu0
        %v1481 = vlaneseq
        %v1482 = vshrl.u32 %v1481, 7
        %v1483 = vsub.s32 2, %v1482
        %v1484 = vrot.slane %v1186, %v1483
        %v1485 = vmul.f32 %v1484, %v1172
        %v1486 = vmul.f32 %v1484, %v1173
        %v1487 = vmul.f32 %v1485, 1.442695
        %v1488 = vpow.pop %v1487
        %v1489 = vmul.f32 %v1486, 1.442695
        %v1490 = vpow.pop %v1489
        %v1491 = vlaneseq
        %v1492 = vshrl.u32 %v1491, 7
        %v1493 = vsub.s32 2, %v1492
        %v1494 = vrot.slane %v1190, %v1493
        %1495 = vset.pattern.permute.xlu0 2
        %1496 = vperm.xlu0 %1495, %v1267
        %v1497 = vpop.permute.xlu0 %1496
        %1499 = vset.pattern.permute.xlu0 2
        %1500 = vperm.xlu0 %1499, %v1272
        %v1501 = vpop.permute.xlu0 %1500
        %v1503 = vmul.f32 %v1494, %v1497
        %v1504 = vmul.f32 %v1494, %v1501
        %v1505 = vmul.f32 %v1488, %v1406
        %v1506 = vmul.f32 %v1490, %v1407
        %v1507 = vadd.f32 %v1505, %v1503
        %v1508 = vadd.f32 %v1506, %v1504
        %v1509 = vrot.slane %v1189, 2
        %v1510 = vsel %vm1163, %v1509, 0
        %1512 = vmatprep.subr.mxu0 0.0
        %1513 = vmatpush1.msra.mxu0 %v1507
        %1514 = vmatprep.subr.mxu0 0.0
        %1515 = vmatpush1.msra.mxu0 %v1508
        %1516 = vmatprep.subr.mxu0 0.0
        %1517 = vmatpush1.msra.mxu0 0.0
        %1518 = vmatprep.subr.mxu0 0.0
        %1519 = vmatpush1.msra.mxu0 0.0
        %1520 = vmatprep.subr.mxu0 0.0
        %1521 = vmatpush1.msra.mxu0 0.0
        %1522 = vmatprep.subr.mxu0 0.0
        %1523 = vmatpush1.msra.mxu0 0.0
        %1524 = vmatprep.subr.mxu0 0.0
        %1525 = vmatpush1.msra.mxu0 0.0
        %1526 = vmatprep.subr.mxu0 0.0
        %1527 = vmatpush1.msra.mxu0 0.0
        %1528 = vmatprep.subr.mxu0 0.0
        %1529 = vmatpush1.msra.mxu0 0.0
        %1530 = vmatprep.subr.mxu0 0.0
        %1531 = vmatpush1.msra.mxu0 0.0
        %1532 = vmatprep.subr.mxu0 0.0
        %1533 = vmatpush1.msra.mxu0 0.0
        %1534 = vmatprep.subr.mxu0 0.0
        %1535 = vmatpush1.msra.mxu0 0.0
        %1536 = vmatprep.subr.mxu0 0.0
        %1537 = vmatpush1.msra.mxu0 0.0
        %1538 = vmatprep.subr.mxu0 0.0
        %1539 = vmatpush1.msra.mxu0 0.0
        %1540 = vmatprep.subr.mxu0 0.0
        %1541 = vmatpush1.msra.mxu0 0.0
        %1542 = vmatprep.subr.mxu0 0.0
        %1543 = vmatpush1.msra.mxu0 0.0
        %1544 = vmatprep.subr.mxu0 0.0
        %1545 = vmatpush1.msra.mxu0 0.0
        %1546 = vmatprep.subr.mxu0 0.0
        %1547 = vmatpush1.msra.mxu0 0.0
        %1548 = vmatprep.subr.mxu0 0.0
        %1549 = vmatpush1.msra.mxu0 0.0
        %1550 = vmatprep.subr.mxu0 0.0
        %1551 = vmatpush1.msra.mxu0 0.0
        %1552 = vmatprep.subr.mxu0 0.0
        %1553 = vmatpush1.msra.mxu0 0.0
        %1554 = vmatprep.subr.mxu0 0.0
        %1555 = vmatpush1.msra.mxu0 0.0
        %1556 = vmatprep.subr.mxu0 0.0
        %1557 = vmatpush1.msra.mxu0 0.0
        %1558 = vmatprep.subr.mxu0 0.0
        %1559 = vmatpush1.msra.mxu0 0.0
        %1560 = vmatprep.subr.mxu0 0.0
        %1561 = vmatpush1.msra.mxu0 0.0
        %1562 = vmatprep.subr.mxu0 0.0
        %1563 = vmatpush1.msra.mxu0 0.0
        %1564 = vmatprep.subr.mxu0 0.0
        %1565 = vmatpush1.msra.mxu0 0.0
        %1566 = vmatprep.subr.mxu0 0.0
        %1567 = vmatpush1.msra.mxu0 0.0
        %1568 = vmatprep.subr.mxu0 0.0
        %1569 = vmatpush1.msra.mxu0 0.0
        %1570 = vmatprep.subr.mxu0 0.0
        %1571 = vmatpush1.msra.mxu0 0.0
        %1572 = vmatprep.subr.mxu0 0.0
        %1573 = vmatpush1.msra.mxu0 0.0
        %1574 = vmatprep.subr.mxu0 0.0
        %1575 = vmatpush1.msra.mxu0 0.0
        %1576 = vmatprep.mubr.f32.mxu0 0.0
        %1577 = vmatmul.mubr.f32.gmra.mrb[0].mxu0 %v1510
        %v1578 = vpop.f32.mrb[0].mxu0
        %v1579 = vadd.f32 0.0, %v1578
        %v1580 = vpop.f32.mrb[0].mxu0
        %1581 = vdwg.mxu0
        %v1582 = vlaneseq
        %v1583 = vshrl.u32 %v1582, 7
        %v1584 = vsub.s32 3, %v1583
        %v1585 = vrot.slane %v1186, %v1584
        %v1586 = vmul.f32 %v1585, %v1172
        %v1587 = vmul.f32 %v1585, %v1173
        %v1588 = vmul.f32 %v1586, 1.442695
        %v1589 = vpow.pop %v1588
        %v1590 = vmul.f32 %v1587, 1.442695
        %v1591 = vpow.pop %v1590
        %v1592 = vlaneseq
        %v1593 = vshrl.u32 %v1592, 7
        %v1594 = vsub.s32 3, %v1593
        %v1595 = vrot.slane %v1190, %v1594
        %1596 = vset.pattern.permute.xlu0 3
        %1597 = vperm.xlu0 %1596, %v1267
        %v1598 = vpop.permute.xlu0 %1597
        %1600 = vset.pattern.permute.xlu0 3
        %1601 = vperm.xlu0 %1600, %v1272
        %v1602 = vpop.permute.xlu0 %1601
        %v1604 = vmul.f32 %v1595, %v1598
        %v1605 = vmul.f32 %v1595, %v1602
        %v1606 = vmul.f32 %v1589, %v1507
        %v1607 = vmul.f32 %v1591, %v1508
        %v1608 = vadd.f32 %v1606, %v1604
        %v1609 = vadd.f32 %v1607, %v1605
        %v1610 = vrot.slane %v1189, 3
        %v1611 = vsel %vm1163, %v1610, 0
        %1613 = vmatprep.subr.mxu0 0.0
        %1614 = vmatpush1.msra.mxu0 %v1608
        %1615 = vmatprep.subr.mxu0 0.0
        %1616 = vmatpush1.msra.mxu0 %v1609
        %1617 = vmatprep.subr.mxu0 0.0
        %1618 = vmatpush1.msra.mxu0 0.0
        %1619 = vmatprep.subr.mxu0 0.0
        %1620 = vmatpush1.msra.mxu0 0.0
        %1621 = vmatprep.subr.mxu0 0.0
        %1622 = vmatpush1.msra.mxu0 0.0
        %1623 = vmatprep.subr.mxu0 0.0
        %1624 = vmatpush1.msra.mxu0 0.0
        %1625 = vmatprep.subr.mxu0 0.0
        %1626 = vmatpush1.msra.mxu0 0.0
        %1627 = vmatprep.subr.mxu0 0.0
        %1628 = vmatpush1.msra.mxu0 0.0
        %1629 = vmatprep.subr.mxu0 0.0
        %1630 = vmatpush1.msra.mxu0 0.0
        %1631 = vmatprep.subr.mxu0 0.0
        %1632 = vmatpush1.msra.mxu0 0.0
        %1633 = vmatprep.subr.mxu0 0.0
        %1634 = vmatpush1.msra.mxu0 0.0
        %1635 = vmatprep.subr.mxu0 0.0
        %1636 = vmatpush1.msra.mxu0 0.0
        %1637 = vmatprep.subr.mxu0 0.0
        %1638 = vmatpush1.msra.mxu0 0.0
        %1639 = vmatprep.subr.mxu0 0.0
        %1640 = vmatpush1.msra.mxu0 0.0
        %1641 = vmatprep.subr.mxu0 0.0
        %1642 = vmatpush1.msra.mxu0 0.0
        %1643 = vmatprep.subr.mxu0 0.0
        %1644 = vmatpush1.msra.mxu0 0.0
        %1645 = vmatprep.subr.mxu0 0.0
        %1646 = vmatpush1.msra.mxu0 0.0
        %1647 = vmatprep.subr.mxu0 0.0
        %1648 = vmatpush1.msra.mxu0 0.0
        %1649 = vmatprep.subr.mxu0 0.0
        %1650 = vmatpush1.msra.mxu0 0.0
        %1651 = vmatprep.subr.mxu0 0.0
        %1652 = vmatpush1.msra.mxu0 0.0
        %1653 = vmatprep.subr.mxu0 0.0
        %1654 = vmatpush1.msra.mxu0 0.0
        %1655 = vmatprep.subr.mxu0 0.0
        %1656 = vmatpush1.msra.mxu0 0.0
        %1657 = vmatprep.subr.mxu0 0.0
        %1658 = vmatpush1.msra.mxu0 0.0
        %1659 = vmatprep.subr.mxu0 0.0
        %1660 = vmatpush1.msra.mxu0 0.0
        %1661 = vmatprep.subr.mxu0 0.0
        %1662 = vmatpush1.msra.mxu0 0.0
        %1663 = vmatprep.subr.mxu0 0.0
        %1664 = vmatpush1.msra.mxu0 0.0
        %1665 = vmatprep.subr.mxu0 0.0
        %1666 = vmatpush1.msra.mxu0 0.0
        %1667 = vmatprep.subr.mxu0 0.0
        %1668 = vmatpush1.msra.mxu0 0.0
        %1669 = vmatprep.subr.mxu0 0.0
        %1670 = vmatpush1.msra.mxu0 0.0
        %1671 = vmatprep.subr.mxu0 0.0
        %1672 = vmatpush1.msra.mxu0 0.0
        %1673 = vmatprep.subr.mxu0 0.0
        %1674 = vmatpush1.msra.mxu0 0.0
        %1675 = vmatprep.subr.mxu0 0.0
        %1676 = vmatpush1.msra.mxu0 0.0
        %1677 = vmatprep.mubr.f32.mxu0 0.0
        %1678 = vmatmul.mubr.f32.gmra.mrb[0].mxu0 %v1611
        %v1679 = vpop.f32.mrb[0].mxu0
        %v1680 = vadd.f32 0.0, %v1679
        %v1681 = vpop.f32.mrb[0].mxu0
        %1682 = vdwg.mxu0
        %v1683 = vlaneseq
        %v1684 = vshrl.u32 %v1683, 7
        %v1685 = vsub.s32 4, %v1684
        %v1686 = vrot.slane %v1186, %v1685
        %v1687 = vmul.f32 %v1686, %v1172
        %v1688 = vmul.f32 %v1686, %v1173
        %v1689 = vmul.f32 %v1687, 1.442695
        %v1690 = vpow.pop %v1689
        %v1691 = vmul.f32 %v1688, 1.442695
        %v1692 = vpow.pop %v1691
        %v1693 = vlaneseq
        %v1694 = vshrl.u32 %v1693, 7
        %v1695 = vsub.s32 4, %v1694
        %v1696 = vrot.slane %v1190, %v1695
        %1697 = vset.pattern.permute.xlu0 4
        %1698 = vperm.xlu0 %1697, %v1267
        %v1699 = vpop.permute.xlu0 %1698
        %1701 = vset.pattern.permute.xlu0 4
        %1702 = vperm.xlu0 %1701, %v1272
        %v1703 = vpop.permute.xlu0 %1702
        %v1705 = vmul.f32 %v1696, %v1699
        %v1706 = vmul.f32 %v1696, %v1703
        %v1707 = vmul.f32 %v1690, %v1608
        %v1708 = vmul.f32 %v1692, %v1609
        %v1709 = vadd.f32 %v1707, %v1705
        %v1710 = vadd.f32 %v1708, %v1706
        %v1711 = vrot.slane %v1189, 4
        %v1712 = vsel %vm1163, %v1711, 0
        %1714 = vmatprep.subr.mxu0 0.0
        %1715 = vmatpush1.msra.mxu0 %v1709
        %1716 = vmatprep.subr.mxu0 0.0
        %1717 = vmatpush1.msra.mxu0 %v1710
        %1718 = vmatprep.subr.mxu0 0.0
        %1719 = vmatpush1.msra.mxu0 0.0
        %1720 = vmatprep.subr.mxu0 0.0
        %1721 = vmatpush1.msra.mxu0 0.0
        %1722 = vmatprep.subr.mxu0 0.0
        %1723 = vmatpush1.msra.mxu0 0.0
        %1724 = vmatprep.subr.mxu0 0.0
        %1725 = vmatpush1.msra.mxu0 0.0
        %1726 = vmatprep.subr.mxu0 0.0
        %1727 = vmatpush1.msra.mxu0 0.0
        %1728 = vmatprep.subr.mxu0 0.0
        %1729 = vmatpush1.msra.mxu0 0.0
        %1730 = vmatprep.subr.mxu0 0.0
        %1731 = vmatpush1.msra.mxu0 0.0
        %1732 = vmatprep.subr.mxu0 0.0
        %1733 = vmatpush1.msra.mxu0 0.0
        %1734 = vmatprep.subr.mxu0 0.0
        %1735 = vmatpush1.msra.mxu0 0.0
        %1736 = vmatprep.subr.mxu0 0.0
        %1737 = vmatpush1.msra.mxu0 0.0
        %1738 = vmatprep.subr.mxu0 0.0
        %1739 = vmatpush1.msra.mxu0 0.0
        %1740 = vmatprep.subr.mxu0 0.0
        %1741 = vmatpush1.msra.mxu0 0.0
        %1742 = vmatprep.subr.mxu0 0.0
        %1743 = vmatpush1.msra.mxu0 0.0
        %1744 = vmatprep.subr.mxu0 0.0
        %1745 = vmatpush1.msra.mxu0 0.0
        %1746 = vmatprep.subr.mxu0 0.0
        %1747 = vmatpush1.msra.mxu0 0.0
        %1748 = vmatprep.subr.mxu0 0.0
        %1749 = vmatpush1.msra.mxu0 0.0
        %1750 = vmatprep.subr.mxu0 0.0
        %1751 = vmatpush1.msra.mxu0 0.0
        %1752 = vmatprep.subr.mxu0 0.0
        %1753 = vmatpush1.msra.mxu0 0.0
        %1754 = vmatprep.subr.mxu0 0.0
        %1755 = vmatpush1.msra.mxu0 0.0
        %1756 = vmatprep.subr.mxu0 0.0
        %1757 = vmatpush1.msra.mxu0 0.0
        %1758 = vmatprep.subr.mxu0 0.0
        %1759 = vmatpush1.msra.mxu0 0.0
        %1760 = vmatprep.subr.mxu0 0.0
        %1761 = vmatpush1.msra.mxu0 0.0
        %1762 = vmatprep.subr.mxu0 0.0
        %1763 = vmatpush1.msra.mxu0 0.0
        %1764 = vmatprep.subr.mxu0 0.0
        %1765 = vmatpush1.msra.mxu0 0.0
        %1766 = vmatprep.subr.mxu0 0.0
        %1767 = vmatpush1.msra.mxu0 0.0
        %1768 = vmatprep.subr.mxu0 0.0
        %1769 = vmatpush1.msra.mxu0 0.0
        %1770 = vmatprep.subr.mxu0 0.0
        %1771 = vmatpush1.msra.mxu0 0.0
        %1772 = vmatprep.subr.mxu0 0.0
        %1773 = vmatpush1.msra.mxu0 0.0
        %1774 = vmatprep.subr.mxu0 0.0
        %1775 = vmatpush1.msra.mxu0 0.0
        %1776 = vmatprep.subr.mxu0 0.0
        %1777 = vmatpush1.msra.mxu0 0.0
        %1778 = vmatprep.mubr.f32.mxu0 0.0
        %1779 = vmatmul.mubr.f32.gmra.mrb[0].mxu0 %v1712
        %v1780 = vpop.f32.mrb[0].mxu0
        %v1781 = vadd.f32 0.0, %v1780
        %v1782 = vpop.f32.mrb[0].mxu0
        %1783 = vdwg.mxu0
        %v1784 = vlaneseq
        %v1785 = vshrl.u32 %v1784, 7
        %v1786 = vsub.s32 5, %v1785
        %v1787 = vrot.slane %v1186, %v1786
        %v1788 = vmul.f32 %v1787, %v1172
        %v1789 = vmul.f32 %v1787, %v1173
        %v1790 = vmul.f32 %v1788, 1.442695
        %v1791 = vpow.pop %v1790
        %v1792 = vmul.f32 %v1789, 1.442695
        %v1793 = vpow.pop %v1792
        %v1794 = vlaneseq
        %v1795 = vshrl.u32 %v1794, 7
        %v1796 = vsub.s32 5, %v1795
        %v1797 = vrot.slane %v1190, %v1796
        %1798 = vset.pattern.permute.xlu0 5
        %1799 = vperm.xlu0 %1798, %v1267
        %v1800 = vpop.permute.xlu0 %1799
        %1802 = vset.pattern.permute.xlu0 5
        %1803 = vperm.xlu0 %1802, %v1272
        %v1804 = vpop.permute.xlu0 %1803
        %v1806 = vmul.f32 %v1797, %v1800
        %v1807 = vmul.f32 %v1797, %v1804
        %v1808 = vmul.f32 %v1791, %v1709
        %v1809 = vmul.f32 %v1793, %v1710
        %v1810 = vadd.f32 %v1808, %v1806
        %v1811 = vadd.f32 %v1809, %v1807
        %v1812 = vrot.slane %v1189, 5
        %v1813 = vsel %vm1163, %v1812, 0
        %1815 = vmatprep.subr.mxu0 0.0
        %1816 = vmatpush1.msra.mxu0 %v1810
        %1817 = vmatprep.subr.mxu0 0.0
        %1818 = vmatpush1.msra.mxu0 %v1811
        %1819 = vmatprep.subr.mxu0 0.0
        %1820 = vmatpush1.msra.mxu0 0.0
        %1821 = vmatprep.subr.mxu0 0.0
        %1822 = vmatpush1.msra.mxu0 0.0
        %1823 = vmatprep.subr.mxu0 0.0
        %1824 = vmatpush1.msra.mxu0 0.0
        %1825 = vmatprep.subr.mxu0 0.0
        %1826 = vmatpush1.msra.mxu0 0.0
        %1827 = vmatprep.subr.mxu0 0.0
        %1828 = vmatpush1.msra.mxu0 0.0
        %1829 = vmatprep.subr.mxu0 0.0
        %1830 = vmatpush1.msra.mxu0 0.0
        %1831 = vmatprep.subr.mxu0 0.0
        %1832 = vmatpush1.msra.mxu0 0.0
        %1833 = vmatprep.subr.mxu0 0.0
        %1834 = vmatpush1.msra.mxu0 0.0
        %1835 = vmatprep.subr.mxu0 0.0
        %1836 = vmatpush1.msra.mxu0 0.0
        %1837 = vmatprep.subr.mxu0 0.0
        %1838 = vmatpush1.msra.mxu0 0.0
        %1839 = vmatprep.subr.mxu0 0.0
        %1840 = vmatpush1.msra.mxu0 0.0
        %1841 = vmatprep.subr.mxu0 0.0
        %1842 = vmatpush1.msra.mxu0 0.0
        %1843 = vmatprep.subr.mxu0 0.0
        %1844 = vmatpush1.msra.mxu0 0.0
        %1845 = vmatprep.subr.mxu0 0.0
        %1846 = vmatpush1.msra.mxu0 0.0
        %1847 = vmatprep.subr.mxu0 0.0
        %1848 = vmatpush1.msra.mxu0 0.0
        %1849 = vmatprep.subr.mxu0 0.0
        %1850 = vmatpush1.msra.mxu0 0.0
        %1851 = vmatprep.subr.mxu0 0.0
        %1852 = vmatpush1.msra.mxu0 0.0
        %1853 = vmatprep.subr.mxu0 0.0
        %1854 = vmatpush1.msra.mxu0 0.0
        %1855 = vmatprep.subr.mxu0 0.0
        %1856 = vmatpush1.msra.mxu0 0.0
        %1857 = vmatprep.subr.mxu0 0.0
        %1858 = vmatpush1.msra.mxu0 0.0
        %1859 = vmatprep.subr.mxu0 0.0
        %1860 = vmatpush1.msra.mxu0 0.0
        %1861 = vmatprep.subr.mxu0 0.0
        %1862 = vmatpush1.msra.mxu0 0.0
        %1863 = vmatprep.subr.mxu0 0.0
        %1864 = vmatpush1.msra.mxu0 0.0
        %1865 = vmatprep.subr.mxu0 0.0
        %1866 = vmatpush1.msra.mxu0 0.0
        %1867 = vmatprep.subr.mxu0 0.0
        %1868 = vmatpush1.msra.mxu0 0.0
        %1869 = vmatprep.subr.mxu0 0.0
        %1870 = vmatpush1.msra.mxu0 0.0
        %1871 = vmatprep.subr.mxu0 0.0
        %1872 = vmatpush1.msra.mxu0 0.0
        %1873 = vmatprep.subr.mxu0 0.0
        %1874 = vmatpush1.msra.mxu0 0.0
        %1875 = vmatprep.subr.mxu0 0.0
        %1876 = vmatpush1.msra.mxu0 0.0
        %1877 = vmatprep.subr.mxu0 0.0
        %1878 = vmatpush1.msra.mxu0 0.0
        %1879 = vmatprep.mubr.f32.mxu0 0.0
        %1880 = vmatmul.mubr.f32.gmra.mrb[0].mxu0 %v1813
        %v1881 = vpop.f32.mrb[0].mxu0
        %v1882 = vadd.f32 0.0, %v1881
        %v1883 = vpop.f32.mrb[0].mxu0
        %1884 = vdwg.mxu0
        %v1885 = vlaneseq
        %v1886 = vshrl.u32 %v1885, 7
        %v1887 = vsub.s32 6, %v1886
        %v1888 = vrot.slane %v1186, %v1887
        %v1889 = vmul.f32 %v1888, %v1172
        %v1890 = vmul.f32 %v1888, %v1173
        %v1891 = vmul.f32 %v1889, 1.442695
        %v1892 = vpow.pop %v1891
        %v1893 = vmul.f32 %v1890, 1.442695
        %v1894 = vpow.pop %v1893
        %v1895 = vlaneseq
        %v1896 = vshrl.u32 %v1895, 7
        %v1897 = vsub.s32 6, %v1896
        %v1898 = vrot.slane %v1190, %v1897
        %1899 = vset.pattern.permute.xlu0 6
        %1900 = vperm.xlu0 %1899, %v1267
        %v1901 = vpop.permute.xlu0 %1900
        %1903 = vset.pattern.permute.xlu0 6
        %1904 = vperm.xlu0 %1903, %v1272
        %v1905 = vpop.permute.xlu0 %1904
        %v1907 = vmul.f32 %v1898, %v1901
        %v1908 = vmul.f32 %v1898, %v1905
        %v1909 = vmul.f32 %v1892, %v1810
        %v1910 = vmul.f32 %v1894, %v1811
        %v1911 = vadd.f32 %v1909, %v1907
        %v1912 = vadd.f32 %v1910, %v1908
        %v1913 = vrot.slane %v1189, 6
        %v1914 = vsel %vm1163, %v1913, 0
        %1916 = vmatprep.subr.mxu0 0.0
        %1917 = vmatpush1.msra.mxu0 %v1911
        %1918 = vmatprep.subr.mxu0 0.0
        %1919 = vmatpush1.msra.mxu0 %v1912
        %1920 = vmatprep.subr.mxu0 0.0
        %1921 = vmatpush1.msra.mxu0 0.0
        %1922 = vmatprep.subr.mxu0 0.0
        %1923 = vmatpush1.msra.mxu0 0.0
        %1924 = vmatprep.subr.mxu0 0.0
        %1925 = vmatpush1.msra.mxu0 0.0
        %1926 = vmatprep.subr.mxu0 0.0
        %1927 = vmatpush1.msra.mxu0 0.0
        %1928 = vmatprep.subr.mxu0 0.0
        %1929 = vmatpush1.msra.mxu0 0.0
        %1930 = vmatprep.subr.mxu0 0.0
        %1931 = vmatpush1.msra.mxu0 0.0
        %1932 = vmatprep.subr.mxu0 0.0
        %1933 = vmatpush1.msra.mxu0 0.0
        %1934 = vmatprep.subr.mxu0 0.0
        %1935 = vmatpush1.msra.mxu0 0.0
        %1936 = vmatprep.subr.mxu0 0.0
        %1937 = vmatpush1.msra.mxu0 0.0
        %1938 = vmatprep.subr.mxu0 0.0
        %1939 = vmatpush1.msra.mxu0 0.0
        %1940 = vmatprep.subr.mxu0 0.0
        %1941 = vmatpush1.msra.mxu0 0.0
        %1942 = vmatprep.subr.mxu0 0.0
        %1943 = vmatpush1.msra.mxu0 0.0
        %1944 = vmatprep.subr.mxu0 0.0
        %1945 = vmatpush1.msra.mxu0 0.0
        %1946 = vmatprep.subr.mxu0 0.0
        %1947 = vmatpush1.msra.mxu0 0.0
        %1948 = vmatprep.subr.mxu0 0.0
        %1949 = vmatpush1.msra.mxu0 0.0
        %1950 = vmatprep.subr.mxu0 0.0
        %1951 = vmatpush1.msra.mxu0 0.0
        %1952 = vmatprep.subr.mxu0 0.0
        %1953 = vmatpush1.msra.mxu0 0.0
        %1954 = vmatprep.subr.mxu0 0.0
        %1955 = vmatpush1.msra.mxu0 0.0
        %1956 = vmatprep.subr.mxu0 0.0
        %1957 = vmatpush1.msra.mxu0 0.0
        %1958 = vmatprep.subr.mxu0 0.0
        %1959 = vmatpush1.msra.mxu0 0.0
        %1960 = vmatprep.subr.mxu0 0.0
        %1961 = vmatpush1.msra.mxu0 0.0
        %1962 = vmatprep.subr.mxu0 0.0
        %1963 = vmatpush1.msra.mxu0 0.0
        %1964 = vmatprep.subr.mxu0 0.0
        %1965 = vmatpush1.msra.mxu0 0.0
        %1966 = vmatprep.subr.mxu0 0.0
        %1967 = vmatpush1.msra.mxu0 0.0
        %1968 = vmatprep.subr.mxu0 0.0
        %1969 = vmatpush1.msra.mxu0 0.0
        %1970 = vmatprep.subr.mxu0 0.0
        %1971 = vmatpush1.msra.mxu0 0.0
        %1972 = vmatprep.subr.mxu0 0.0
        %1973 = vmatpush1.msra.mxu0 0.0
        %1974 = vmatprep.subr.mxu0 0.0
        %1975 = vmatpush1.msra.mxu0 0.0
        %1976 = vmatprep.subr.mxu0 0.0
        %1977 = vmatpush1.msra.mxu0 0.0
        %1978 = vmatprep.subr.mxu0 0.0
        %1979 = vmatpush1.msra.mxu0 0.0
        %1980 = vmatprep.mubr.f32.mxu0 0.0
        %1981 = vmatmul.mubr.f32.gmra.mrb[0].mxu0 %v1914
        %v1982 = vpop.f32.mrb[0].mxu0
        %v1983 = vadd.f32 0.0, %v1982
        %v1984 = vpop.f32.mrb[0].mxu0
        %1985 = vdwg.mxu0
        %v1986 = vlaneseq
        %v1987 = vshrl.u32 %v1986, 7
        %v1988 = vsub.s32 7, %v1987
        %v1989 = vrot.slane %v1186, %v1988
        %v1990 = vmul.f32 %v1989, %v1172
        %v1991 = vmul.f32 %v1989, %v1173
        %v1992 = vmul.f32 %v1990, 1.442695
        %v1993 = vpow.pop %v1992
        %v1994 = vmul.f32 %v1991, 1.442695
        %v1995 = vpow.pop %v1994
        %v1996 = vlaneseq
        %v1997 = vshrl.u32 %v1996, 7
        %v1998 = vsub.s32 7, %v1997
        %v1999 = vrot.slane %v1190, %v1998
        %2000 = vset.pattern.permute.xlu0 7
        %2001 = vperm.xlu0 %2000, %v1267
        %v2002 = vpop.permute.xlu0 %2001
        %2004 = vset.pattern.permute.xlu0 7
        %2005 = vperm.xlu0 %2004, %v1272
        %v2006 = vpop.permute.xlu0 %2005
        %v2008 = vmul.f32 %v1999, %v2002
        %v2009 = vmul.f32 %v1999, %v2006
        %v2010 = vmul.f32 %v1993, %v1911
        %v2011 = vmul.f32 %v1995, %v1912
        %v2012 = vadd.f32 %v2010, %v2008
        %v2013 = vadd.f32 %v2011, %v2009
        %v2014 = vrot.slane %v1189, 7
        %v2015 = vsel %vm1163, %v2014, 0
        %2017 = vmatprep.subr.mxu0 0.0
        %2018 = vmatpush1.msra.mxu0 %v2012
        %2019 = vmatprep.subr.mxu0 0.0
        %2020 = vmatpush1.msra.mxu0 %v2013
        %2021 = vmatprep.subr.mxu0 0.0
        %2022 = vmatpush1.msra.mxu0 0.0
        %2023 = vmatprep.subr.mxu0 0.0
        %2024 = vmatpush1.msra.mxu0 0.0
        %2025 = vmatprep.subr.mxu0 0.0
        %2026 = vmatpush1.msra.mxu0 0.0
        %2027 = vmatprep.subr.mxu0 0.0
        %2028 = vmatpush1.msra.mxu0 0.0
        %2029 = vmatprep.subr.mxu0 0.0
        %2030 = vmatpush1.msra.mxu0 0.0
        %2031 = vmatprep.subr.mxu0 0.0
        %2032 = vmatpush1.msra.mxu0 0.0
        %2033 = vmatprep.subr.mxu0 0.0
        %2034 = vmatpush1.msra.mxu0 0.0
        %2035 = vmatprep.subr.mxu0 0.0
        %2036 = vmatpush1.msra.mxu0 0.0
        %2037 = vmatprep.subr.mxu0 0.0
        %2038 = vmatpush1.msra.mxu0 0.0
        %2039 = vmatprep.subr.mxu0 0.0
        %2040 = vmatpush1.msra.mxu0 0.0
        %2041 = vmatprep.subr.mxu0 0.0
        %2042 = vmatpush1.msra.mxu0 0.0
        %2043 = vmatprep.subr.mxu0 0.0
        %2044 = vmatpush1.msra.mxu0 0.0
        %2045 = vmatprep.subr.mxu0 0.0
        %2046 = vmatpush1.msra.mxu0 0.0
        %2047 = vmatprep.subr.mxu0 0.0
        %2048 = vmatpush1.msra.mxu0 0.0
        %2049 = vmatprep.subr.mxu0 0.0
        %2050 = vmatpush1.msra.mxu0 0.0
        %2051 = vmatprep.subr.mxu0 0.0
        %2052 = vmatpush1.msra.mxu0 0.0
        %2053 = vmatprep.subr.mxu0 0.0
        %2054 = vmatpush1.msra.mxu0 0.0
        %2055 = vmatprep.subr.mxu0 0.0
        %2056 = vmatpush1.msra.mxu0 0.0
        %2057 = vmatprep.subr.mxu0 0.0
        %2058 = vmatpush1.msra.mxu0 0.0
        %2059 = vmatprep.subr.mxu0 0.0
        %2060 = vmatpush1.msra.mxu0 0.0
        %2061 = vmatprep.subr.mxu0 0.0
        %2062 = vmatpush1.msra.mxu0 0.0
        %2063 = vmatprep.subr.mxu0 0.0
        %2064 = vmatpush1.msra.mxu0 0.0
        %2065 = vmatprep.subr.mxu0 0.0
        %2066 = vmatpush1.msra.mxu0 0.0
        %2067 = vmatprep.subr.mxu0 0.0
        %2068 = vmatpush1.msra.mxu0 0.0
        %2069 = vmatprep.subr.mxu0 0.0
        %2070 = vmatpush1.msra.mxu0 0.0
        %2071 = vmatprep.subr.mxu0 0.0
        %2072 = vmatpush1.msra.mxu0 0.0
        %2073 = vmatprep.subr.mxu0 0.0
        %2074 = vmatpush1.msra.mxu0 0.0
        %2075 = vmatprep.subr.mxu0 0.0
        %2076 = vmatpush1.msra.mxu0 0.0
        %2077 = vmatprep.subr.mxu0 0.0
        %2078 = vmatpush1.msra.mxu0 0.0
        %2079 = vmatprep.subr.mxu0 0.0
        %2080 = vmatpush1.msra.mxu0 0.0
        %2081 = vmatprep.mubr.f32.mxu0 0.0
        %2082 = vmatmul.mubr.f32.gmra.mrb[0].mxu0 %v2015
        %v2083 = vpop.f32.mrb[0].mxu0
        %v2084 = vadd.f32 0.0, %v2083
        %v2085 = vpop.f32.mrb[0].mxu0
        %2086 = vdwg.mxu0
        %2087 = vst.msk [vmem:[#allocation2] sm:$0xff] %vm822, %v2012
        %2088 = vst.msk [vmem:[#allocation2 + $0x8] sm:$0xff] %vm822, %v2013
        %v2090 = vrot.slane %v1478, 7
        %v2093 = vrot.slane %v1579, 6
        %v2096 = vrot.slane %v1680, 5
        %v2099 = vrot.slane %v1781, 4
        %v2102 = vrot.slane %v1882, 3
        %v2105 = vrot.slane %v1983, 2
        %v2108 = vrot.slane %v2084, 1
        %v2110 = vsel %vm1102, %v1377, %v2090
        %vm2111 = vcmask 1041408
        %v2112 = vsel %vm2111, %v2110, %v2093
        %vm2113 = vcmask 1042432
        %v2114 = vsel %vm2113, %v2112, %v2096
        %vm2115 = vcmask 1043456
        %v2116 = vsel %vm2115, %v2114, %v2099
        %vm2117 = vcmask 1044480
        %v2118 = vsel %vm2117, %v2116, %v2102
        %vm2119 = vcmask 1045504
        %v2120 = vsel %vm2119, %v2118, %v2105
        %vm2121 = vcmask 1046528
        %v2122 = vsel %vm2121, %v2120, %v2108
        %v2124 = vlaneseq
        %v2125 = vshrl.u32 %v2124, 7
        %v2126 = vsub.s32 0, %v2125
        %v2127 = vrot.slane %v1174, %v2126
        %v2129 = vmul.f32 %v1187, %v2127
        %v2130 = vadd.f32 %v2122, %v2129
        %2131 = vst.msk [vmem:[#allocation8] sm:$0xff] %vm822, %v2130
        %v2132 = vld [vmem:[#allocation8] sm:$0xff]
        %v2133 = vsub.f32 0.0, %v817
        %v2134 = vmul.f32 %v2133, 1.442695
        %v2135 = vpow.pop %v2134
        %v2136 = vadd.f32 %v2135, 1.0
        %v2137 = vrcp.pop %v2136
        %v2138 = vmul.f32 1.0, %v2137
        %v2139 = vmul.f32 %v817, %v2138
        %v2140 = vmul.f32 %v2132, %v2139
        %v2141 = vpack.c.bf16 %v2140, %v2140
        %v2142 = vld [vmem:[#allocation30] sm:$0xf]
        %v2143 = vld [vmem:[#allocation30 + $0x4] sm:$0xf]
        %v2144 = vld [vmem:[#allocation30 + $0x8] sm:$0xf]
        %v2145 = vld [vmem:[#allocation30 + $0xc] sm:$0xf]
        %v2146 = vld [vmem:[#allocation30 + $0x10] sm:$0xf]
        %v2147 = vld [vmem:[#allocation30 + $0x14] sm:$0xf]
        %v2148 = vld [vmem:[#allocation30 + $0x18] sm:$0xf]
        %v2149 = vld [vmem:[#allocation30 + $0x1c] sm:$0xf]
        %v2158 = vunpack.c.l.b16 %v2142
        %v2159 = vunpack.c.l.b16 %v2143
        %v2160 = vunpack.c.l.b16 %v2144
        %v2161 = vunpack.c.l.b16 %v2145
        %v2162 = vunpack.c.l.b16 %v2146
        %v2163 = vunpack.c.l.b16 %v2147
        %v2164 = vunpack.c.l.b16 %v2148
        %v2165 = vunpack.c.l.b16 %v2149
        %v2166 = vpack.c.b16 %v2159, %v2158
        %v2167 = vpack.c.b16 %v2161, %v2160
        %v2168 = vpack.c.b16 %v2163, %v2162
        %v2169 = vpack.c.b16 %v2165, %v2164
        %v2175 = vsel %vm822, %v2141, 0
        %2177 = vmatprep.subr.bf16.mxu0 0
        %2178 = vmatpush1.bf16.msra.mxu0 %v2166
        %2179 = vmatprep.subr.bf16.mxu0 0
        %2180 = vmatpush1.bf16.msra.mxu0 %v2167
        %2181 = vmatprep.subr.bf16.mxu0 0
        %2182 = vmatpush1.bf16.msra.mxu0 %v2168
        %2183 = vmatprep.subr.bf16.mxu0 0
        %2184 = vmatpush1.bf16.msra.mxu0 %v2169
        %2185 = vmatprep.subr.bf16.mxu0 0
        %2186 = vmatpush1.bf16.msra.mxu0 0
        %2187 = vmatprep.subr.bf16.mxu0 0
        %2188 = vmatpush1.bf16.msra.mxu0 0
        %2189 = vmatprep.subr.bf16.mxu0 0
        %2190 = vmatpush1.bf16.msra.mxu0 0
        %2191 = vmatprep.subr.bf16.mxu0 0
        %2192 = vmatpush1.bf16.msra.mxu0 0
        %2193 = vmatprep.subr.bf16.mxu0 0
        %2194 = vmatpush1.bf16.msra.mxu0 0
        %2195 = vmatprep.subr.bf16.mxu0 0
        %2196 = vmatpush1.bf16.msra.mxu0 0
        %2197 = vmatprep.subr.bf16.mxu0 0
        %2198 = vmatpush1.bf16.msra.mxu0 0
        %2199 = vmatprep.subr.bf16.mxu0 0
        %2200 = vmatpush1.bf16.msra.mxu0 0
        %2201 = vmatprep.subr.bf16.mxu0 0
        %2202 = vmatpush1.bf16.msra.mxu0 0
        %2203 = vmatprep.subr.bf16.mxu0 0
        %2204 = vmatpush1.bf16.msra.mxu0 0
        %2205 = vmatprep.subr.bf16.mxu0 0
        %2206 = vmatpush1.bf16.msra.mxu0 0
        %2207 = vmatprep.subr.bf16.mxu0 0
        %2208 = vmatpush1.bf16.msra.mxu0 0
        %2209 = vmatprep.mubr.bf16.mxu0 0
        %2210 = vmatmul.mubr.bf16.gmra.mrb[0].mxu0 %v2175
        %v2211 = vpop.f32.mrb[0].mxu0
        %v2212 = vadd.f32 %v687, %v2211
        %v2213 = vpop.f32.mrb[0].mxu0
        %v2214 = vpop.f32.mrb[0].mxu0
        %v2215 = vpop.f32.mrb[0].mxu0
        %2216 = vdwg.mxu0
        %2217 = vst.msk [vmem:[%s676] sm:$0xff] %vm689, %v2212
        %s2218 = sand.u32 %s361, 1
        %s2219 = scalar_lea.sflag [#allocation11], %s2218
        %s2220 = sand.u32 %s361, 1
        %s2221 = smul.addr %s2220, 8
        %s2222 = scalar_lea.vmem [#allocation32], %s2221
        // Predicated region
        $region137: #{tpu_custom_call.1} parent=75 // pred_check
          %p2223 = pneg %p371
        $region138: #{tpu_custom_call.1} parent=75 // pred_check_branch
          %2225 = sbr.rel (%p2223) target = $region140
        $region139: #{tpu_custom_call.1} parent=75 // pred_region
          %s2227 = ssub.s32 128, 128
          %2228 = vsyncadd %s2219, %s2227
          %s2229 = sadd.s32 %s43, %s42
          %s2230 = smul.addr %s2229, 128
          %s2231 = scalar_lea.hbm %s14, %s2230
          %s2233 = sshll.u32 %s2222, 4
          %s2234 = int_to_ptr.vmem [resolvable:$true] %s2233
          %2236 = dma.vmem_to_hbm [thread:$0]  %s2234, 128, %s2231, %s2219
        $region140: #{tpu_custom_call.1} parent=75 // pred_fallthru
          _
      $region76: #{tpu_custom_call.1} parent=5 // pred_fallthru
        _
      %p2237 = scmp.le.s32.totalorder 2, %s33
      // Predicated region
      $region141: #{tpu_custom_call.1} parent=5 // pred_check
        %p2238 = pneg %p2237
      $region142: #{tpu_custom_call.1} parent=5 // pred_check_branch
        %2240 = sbr.rel (%p2238) target = $region144
      $region143: #{tpu_custom_call.1} parent=5 // pred_region
        %s2241 = ssub.s32 %s33, 2
        // Predicated region
        $region145: #{tpu_custom_call.1} parent=143 // pred_check
          %p2242 = pneg %p377
        $region146: #{tpu_custom_call.1} parent=143 // pred_check_branch
          %2244 = sbr.rel (%p2242) target = $region148
        $region147: #{tpu_custom_call.1} parent=143 // pred_region
          %s2245 = sand.u32 %s362, 1
          %s2246 = scalar_lea.sflag [#allocation11], %s2245
          %s2247 = sand.u32 %s362, 1
          %s2248 = smul.addr %s2247, 8
          %s2249 = scalar_lea.vmem [#allocation32], %s2248
          %2250 = dma.done %s2246, 128
        $region148: #{tpu_custom_call.1} parent=143 // pred_fallthru
          _
      $region144: #{tpu_custom_call.1} parent=5 // pred_fallthru
        _
    $region6: #{tpu_custom_call.1} parent=1 // loop_footer
      %s37 = sadd.s32 1, %s33
    $region7: #{tpu_custom_call.1} parent=1 // loop_footer_branch
      %32 = sbr.rel target = $region3
    $region8: #{tpu_custom_call.1} parent=1 // loop_exit
      _
    %2251 = vsyncpa [#allocation10], 1
    %s2252 = scalar_lea.sflag [#allocation10], 1
    %2253 = vsyncpa %s2252, 1
    %2254 = vsyncpa [#allocation13], 1
    %2255 = vsyncpa [#allocation16], 1
    %2256 = vsyncpa [#allocation19], 1
    %2257 = vsyncpa [#allocation22], 1
    %2258 = vsyncpa [#allocation25], 1
    %2259 = vsyncpa [#allocation28], 1
    %2260 = vsyncpa [#allocation31], 1
    %2261 = vsyncpa [#allocation11], 1
    %s2262 = scalar_lea.sflag [#allocation11], 1
    %2263 = vsyncpa %s2262, 1

</llo_original>
